<compile_context>
chip_gen: v5e
topology: v5e:2x2
jax: 0.10.0
libtpu: 0.0.40
codegen_flags: <defaults>
</compile_context>

<pallas_src>
import functools

import jax
import jax.numpy as jnp
from jax.experimental import pallas as pl
from jax.experimental.pallas import tpu as pltpu


def _tile(n, target, quantum):
    """Largest multiple of `quantum` <= `target` that divides n, else full n.

    Full-extent blocks are always legal; aligned divisors keep big point
    clouds pipelined without any padding / masking.
    """
    if n <= target or n % quantum:
        return n
    t = (target // quantum) * quantum
    while n % t:
        t -= quantum
    return t


# ----------------------------------------------------------------------------
# Kernel 1: kNN scores  s[b,i,j] = 2<x_i,x_j> - ||x_j||^2   (channels-first)
# Row-wise top-k of s equals top-k of the reference -||x_i - x_j||^2 because
# the dropped -||x_i||^2 term is constant along the top-k (j) axis.
# ----------------------------------------------------------------------------
def _knn_score_kernel(xi_ref, xj_ref, out_ref):
    xi = xi_ref[0]                                               # (C, ti)
    xj = xj_ref[0]                                               # (C, tj)
    # Gram matrix contracting the channel dim of both operands (xi^T @ xj).
    g = jax.lax.dot_general(xi, xj, (((0,), (0,)), ((), ())),
                            preferred_element_type=jnp.float32)  # (ti, tj)
    sq_j = jnp.sum(xj * xj, axis=0, keepdims=True)               # (1, tj)
    out_ref[0] = 2.0 * g - sq_j


def _neighbor_scores(x):
    """x: (B, C, N) channels-first -> (B, N, N) float32 scores."""
    B, C, N = x.shape
    ti = _tile(N, 256, 128)    # sublane axis of the output tile
    tj = _tile(N, 512, 128)    # lane axis of the output tile (lane-dense)
    return pl.pallas_call(
        _knn_score_kernel,
        out_shape=jax.ShapeDtypeStruct((B, N, N), jnp.float32),
        grid=(B, N // ti, N // tj),
        in_specs=[
            pl.BlockSpec((1, C, ti), lambda b, i, j: (b, 0, i)),
            pl.BlockSpec((1, C, tj), lambda b, i, j: (b, 0, j)),
        ],
        out_specs=pl.BlockSpec((1, ti, tj), lambda b, i, j: (b, i, j)),
        compiler_params=pltpu.CompilerParams(
            dimension_semantics=("parallel", "parallel", "parallel")),
    )(x, x)


# ----------------------------------------------------------------------------
# Kernel 2: fused edge-conv with in-kernel neighbor gather (channels-first)
#   proj_d = Wd' @ x            (whole batch, computed once per batch)
#   out[:, m] = LeakyReLU( max_j proj_d[:, idx[j,m]] + Wc' @ x[:, m] + bias )
# where Wd' = scale * Wd, Wc' = scale * (Wc - Wd)  (BN + centre-subtract
# folded into the weights by the wrapper).
# ----------------------------------------------------------------------------
def _edgeconv_kernel(idxT_ref, xfull_ref, xc_ref, wd_ref, wc_ref, bias_ref,
                     out_ref, projd_ref):
    # Project the whole batch's points once (row-tile 0 of each batch).
    @pl.when(pl.program_id(1) == 0)
    def _():
        projd_ref[...] = jnp.dot(wd_ref[...], xfull_ref[0],
                                 preferred_element_type=jnp.float32)

    idxT = idxT_ref[0]                                           # (kk, tn) int32
    kk, tn = idxT.shape
    n = xfull_ref.shape[2]

    # Center contribution (BN shift folded into bias).
    cent = jnp.dot(wc_ref[...], xc_ref[0],
                   preferred_element_type=jnp.float32) + bias_ref[...]  # (Cout, tn)

    proj_d = projd_ref[...]                                      # (Cout, N)

    # Gather the K neighbor projections with one-hot MXU matmuls and take the
    # running max (max over k commutes with +cent and with LeakyReLU).
    iota_pts = jax.lax.broadcasted_iota(jnp.int32, (n, tn), 0)
    acc = None
    for j in range(kk):                          # k is small and static
        onehot = (idxT[j:j + 1, :] == iota_pts).astype(jnp.float32)   # (N, tn)
        g = jnp.dot(proj_d, onehot, preferred_element_type=jnp.float32)
        acc = g if acc is None else jnp.maximum(acc, g)

    y = acc + cent
    out_ref[0] = jnp.where(y >= 0.0, y, 0.2 * y).astype(out_ref.dtype)   # LeakyReLU(0.2)


def _edge_conv_layer(x, w, scale, bias, k):
    """x: (B, C, N) channels-first -> (B, Cout, N) channels-first."""
    B, C, N = x.shape
    kk = N if N < k else k
    Cout = w.shape[0]

    score = _neighbor_scores(x)                                  # (B, N, N) [Pallas]
    # TODO(synk): top-k neighbor selection stays in plain JAX (no Pallas
    # sort/top-k primitive); matches torch.topk(largest, sorted).
    idx = jax.lax.top_k(score, kk)[1].astype(jnp.int32)          # (B, N, kk)
    idxT = jnp.swapaxes(idx, 1, 2)                               # (B, kk, N), tiny

    # Fold BatchNorm scale and the centre subtraction into the weights:
    #   ((neigh - cent) @ Wd^T + cent @ Wc^T) * s + b
    #     = neigh @ (s Wd)^T + cent @ (s (Wc - Wd))^T + b
    wd = w[:, :C] * scale[:, None]                               # (Cout, C)
    wc = (w[:, C:] - w[:, :C]) * scale[:, None]                  # (Cout, C)
    bias_col = bias.reshape(Cout, 1).astype(jnp.float32)

    tn = _tile(N, 256, 128)
    return pl.pallas_call(
        _edgeconv_kernel,
        out_shape=jax.ShapeDtypeStruct((B, Cout, N), jnp.float32),
        grid=(B, N // tn),
        in_specs=[
            pl.BlockSpec((1, kk, tn), lambda b, i: (b, 0, i)),   # neighbor indices
            pl.BlockSpec((1, C, N), lambda b, i: (b, 0, 0)),     # whole-batch points
            pl.BlockSpec((1, C, tn), lambda b, i: (b, 0, i)),    # center tile
            pl.BlockSpec((Cout, C), lambda b, i: (0, 0)),        # Wd'
            pl.BlockSpec((Cout, C), lambda b, i: (0, 0)),        # Wc'
            pl.BlockSpec((Cout, 1), lambda b, i: (0, 0)),        # bias
        ],
        out_specs=pl.BlockSpec((1, Cout, tn), lambda b, i: (b, 0, i)),
        scratch_shapes=[pltpu.VMEM((Cout, N), jnp.float32)],     # proj_d per batch
        compiler_params=pltpu.CompilerParams(
            dimension_semantics=("parallel", "arbitrary")),
    )(idxT, x, x, wd, wc, bias_col)


@functools.partial(jax.jit, static_argnames=("k",))
def local_embedder_forward(x, params, k):
    """LocalEmbedder.forward.  x: (B, C_in, N) -> (B, C_out, N)."""
    repeat = x.shape[-1] == 1
    if repeat:
        x = jnp.tile(x, (1, 1, 2))
    h1 = _edge_conv_layer(x, params["w1"], params["scale1"], params["bias1"], k)
    out = _edge_conv_layer(h1, params["w2"], params["scale2"], params["bias2"], k)
    if repeat:
        out = out[..., :1]
    return out


# ----------------------------------------------------------------------------
# Pure-JAX reference (mirrors the PyTorch forward, inference-mode BatchNorm)
# ----------------------------------------------------------------------------
def _ref_layer(x, w, scale, bias, k):
    B, C, N = x.shape
    kk = N if N < k else k
    xt = jnp.swapaxes(x, 1, 2)                                   # (B, N, C)
    inner = jnp.einsum("bnc,bcm->bnm", xt, x)
    xx = jnp.sum(xt * xt, axis=-1)
    pd = 2.0 * inner - xx[:, :, None] - xx[:, None, :]
    idx = jax.lax.top_k(pd, kk)[1]
    neigh = jax.vmap(lambda xb, ib: xb[ib])(xt, idx)             # (B, N, kk, C)
    cent = jnp.broadcast_to(xt[:, :, None, :], neigh.shape)
    edge = jnp.concatenate([neigh - cent, cent], axis=-1)        # (B, N, kk, 2C)
    y = jnp.einsum("bnkc,oc->bnko", edge, w)
    y = y * scale + bias
    y = jnp.where(y >= 0.0, y, 0.2 * y)
    y = jnp.max(y, axis=2)                                       # (B, N, Cout)
    return jnp.transpose(y, (0, 2, 1))


def _ref_forward(x, params, k):
    if x.shape[-1] == 1:
        x = jnp.tile(x, (1, 1, 2))
        out = _ref_layer(_ref_layer(x, params["w1"], params["scale1"], params["bias1"], k),
                         params["w2"], params["scale2"], params["bias2"], k)
        return out[..., :1]
    x1 = _ref_layer(x, params["w1"], params["scale1"], params["bias1"], k)
    return _ref_layer(x1, params["w2"], params["scale2"], params["bias2"], k)


# ----------------------------------------------------------------------------
# Deterministic parameter construction (Conv2d 1x1 weights + folded BatchNorm)
# ----------------------------------------------------------------------------
def make_params(key, input_dim, output_dim):
    eps = 1e-5
    ks = jax.random.split(key, 10)

    def bn_fold(kg, kb, km, kv, dim):
        gamma = 1.0 + 0.1 * jax.random.normal(kg, (dim,), jnp.float32)
        beta = 0.1 * jax.random.normal(kb, (dim,), jnp.float32)
        mean = 0.05 * jax.random.normal(km, (dim,), jnp.float32)
        var = 1.0 + 0.1 * jnp.abs(jax.random.normal(kv, (dim,), jnp.float32))
        scale = gamma / jnp.sqrt(var + eps)
        bias = beta - mean * scale
        return scale, bias

    w1 = 0.1 * jax.random.normal(ks[0], (output_dim, 2 * input_dim), jnp.float32)
    scale1, bias1 = bn_fold(ks[1], ks[2], ks[3], ks[4], output_dim)
    w2 = 0.1 * jax.random.normal(ks[5], (output_dim, 2 * output_dim), jnp.float32)
    scale2, bias2 = bn_fold(ks[6], ks[7], ks[8], ks[9], output_dim)
    return {"w1": w1, "scale1": scale1, "bias1": bias1,
            "w2": w2, "scale2": scale2, "bias2": bias2}


if __name__ == "__main__":
    B, C_IN, N = 2, 4, 16          # small point cloud: (batch, input_dim, num_points)
    C_OUT, K = 32, 8

    key = jax.random.PRNGKey(0)
    kx, kp = jax.random.split(key)
    x = jax.random.normal(kx, (B, C_IN, N), jnp.float32)
    params = make_params(kp, C_IN, C_OUT)

    out = local_embedder_forward(x, params, K)
    out = jax.block_until_ready(out)

    ref = jax.block_until_ready(_ref_forward(x, params, K))
    assert out.shape == (B, C_OUT, N), out.shape
    assert jnp.allclose(out, ref, atol=1e-3, rtol=1e-3), float(jnp.max(jnp.abs(out - ref)))

    print("KERNEL_OK")
</pallas_src>

<mosaic_0001>
module attributes {stable_mosaic.version = 11 : i64} {
  func.func @_knn_score_kernel(%arg0: i32, %arg1: i32, %arg2: i32, %arg3: memref<1x32x16xf32, #tpu.memory_space<vmem>>, %arg4: memref<1x32x16xf32, #tpu.memory_space<vmem>>, %arg5: memref<1x16x16xf32, #tpu.memory_space<vmem>>) attributes {dimension_semantics = [#tpu.dimension_semantics<parallel>, #tpu.dimension_semantics<parallel>, #tpu.dimension_semantics<parallel>], iteration_bounds = array<i64: 2, 1, 1>, scalar_prefetch = 0 : i64, scratch_operands = 0 : i64, tpu.core_type = #tpu.core_type<tc>, window_params = [{transform_indices = @transform_0, window_bounds = array<i64: 1, 32, 16>}, {transform_indices = @transform_1, window_bounds = array<i64: 1, 32, 16>}, {transform_indices = @transform_2, window_bounds = array<i64: 1, 16, 16>}]} {
    %c0 = arith.constant 0 : index
    %c0_0 = arith.constant 0 : index
    %c0_1 = arith.constant 0 : index
    %0 = vector.load %arg3[%c0, %c0_0, %c0_1] : memref<1x32x16xf32, #tpu.memory_space<vmem>>, vector<1x32x16xf32>
    %1 = vector.shape_cast %0 : vector<1x32x16xf32> to vector<32x16xf32>
    %c0_2 = arith.constant 0 : index
    %c0_3 = arith.constant 0 : index
    %c0_4 = arith.constant 0 : index
    %2 = vector.load %arg4[%c0_2, %c0_3, %c0_4] : memref<1x32x16xf32, #tpu.memory_space<vmem>>, vector<1x32x16xf32>
    %3 = vector.shape_cast %2 : vector<1x32x16xf32> to vector<32x16xf32>
    %cst = arith.constant dense<0.000000e+00> : vector<16x16xf32>
    %4 = tpu.matmul %1, %3, %cst {dimension_numbers = #tpu.dot_dimension_numbers<[0], [0], [1], [1], [0, 1, 1, 1], [], []>} : vector<32x16xf32>, vector<32x16xf32>, vector<16x16xf32> -> vector<16x16xf32>
    %5 = arith.mulf %3, %3 : vector<32x16xf32>
    %cst_5 = arith.constant dense<0.000000e+00> : vector<16xf32>
    %6 = vector.multi_reduction <add>, %5, %cst_5 [0] : vector<32x16xf32> to vector<16xf32>
    %7 = vector.shape_cast %6 : vector<16xf32> to vector<1x16xf32>
    %cst_6 = arith.constant 2.000000e+00 : f32
    %8 = vector.broadcast %cst_6 : f32 to vector<16x16xf32>
    %9 = arith.mulf %8, %4 : vector<16x16xf32>
    %10 = vector.broadcast %7 : vector<1x16xf32> to vector<16x16xf32>
    %11 = arith.subf %9, %10 : vector<16x16xf32>
    %c0_7 = arith.constant 0 : index
    %c0_8 = arith.constant 0 : index
    %c0_9 = arith.constant 0 : index
    %12 = vector.load %arg5[%c0_7, %c0_8, %c0_9] : memref<1x16x16xf32, #tpu.memory_space<vmem>>, vector<1x16x16xf32>
    %13 = vector.shape_cast %12 : vector<1x16x16xf32> to vector<16x16xf32>
    %14 = vector.shape_cast %11 : vector<16x16xf32> to vector<1x16x16xf32>
    tpu.vector_store %arg5[%c0_7, %c0_8, %c0_9], %14 {strides = array<i32>} : memref<1x16x16xf32, #tpu.memory_space<vmem>>, vector<1x16x16xf32>,
    return
  }
  func.func @transform_0(%arg0: i32, %arg1: i32, %arg2: i32) -> (i32, i32, i32) {
    %c0_i32 = arith.constant 0 : i32
    %c0_i32_0 = arith.constant 0 : i32
    return %arg0, %c0_i32, %arg1 : i32, i32, i32
  }
  func.func @transform_1(%arg0: i32, %arg1: i32, %arg2: i32) -> (i32, i32, i32) {
    %c0_i32 = arith.constant 0 : i32
    %c0_i32_0 = arith.constant 0 : i32
    return %arg0, %c0_i32, %arg2 : i32, i32, i32
  }
  func.func @transform_2(%arg0: i32, %arg1: i32, %arg2: i32) -> (i32, i32, i32) {
    %c0_i32 = arith.constant 0 : i32
    return %arg0, %arg1, %arg2 : i32, i32, i32
  }
}

module attributes {stable_mosaic.version = 11 : i64} {
  func.func @_knn_score_kernel(%arg0: i32, %arg1: i32, %arg2: i32, %arg3: memref<1x4x16xf32, #tpu.memory_space<vmem>>, %arg4: memref<1x4x16xf32, #tpu.memory_space<vmem>>, %arg5: memref<1x16x16xf32, #tpu.memory_space<vmem>>) attributes {dimension_semantics = [#tpu.dimension_semantics<parallel>, #tpu.dimension_semantics<parallel>, #tpu.dimension_semantics<parallel>], iteration_bounds = array<i64: 2, 1, 1>, scalar_prefetch = 0 : i64, scratch_operands = 0 : i64, tpu.core_type = #tpu.core_type<tc>, window_params = [{transform_indices = @transform_0, window_bounds = array<i64: 1, 4, 16>}, {transform_indices = @transform_1, window_bounds = array<i64: 1, 4, 16>}, {transform_indices = @transform_2, window_bounds = array<i64: 1, 16, 16>}]} {
    %c0 = arith.constant 0 : index
    %c0_0 = arith.constant 0 : index
    %c0_1 = arith.constant 0 : index
    %0 = vector.load %arg3[%c0, %c0_0, %c0_1] : memref<1x4x16xf32, #tpu.memory_space<vmem>>, vector<1x4x16xf32>
    %1 = vector.shape_cast %0 : vector<1x4x16xf32> to vector<4x16xf32>
    %c0_2 = arith.constant 0 : index
    %c0_3 = arith.constant 0 : index
    %c0_4 = arith.constant 0 : index
    %2 = vector.load %arg4[%c0_2, %c0_3, %c0_4] : memref<1x4x16xf32, #tpu.memory_space<vmem>>, vector<1x4x16xf32>
    %3 = vector.shape_cast %2 : vector<1x4x16xf32> to vector<4x16xf32>
    %cst = arith.constant dense<0.000000e+00> : vector<16x16xf32>
    %4 = tpu.matmul %1, %3, %cst {dimension_numbers = #tpu.dot_dimension_numbers<[0], [0], [1], [1], [0, 1, 1, 1], [], []>} : vector<4x16xf32>, vector<4x16xf32>, vector<16x16xf32> -> vector<16x16xf32>
    %5 = arith.mulf %3, %3 : vector<4x16xf32>
    %cst_5 = arith.constant dense<0.000000e+00> : vector<16xf32>
    %6 = vector.multi_reduction <add>, %5, %cst_5 [0] : vector<4x16xf32> to vector<16xf32>
    %7 = vector.shape_cast %6 : vector<16xf32> to vector<1x16xf32>
    %cst_6 = arith.constant 2.000000e+00 : f32
    %8 = vector.broadcast %cst_6 : f32 to vector<16x16xf32>
    %9 = arith.mulf %8, %4 : vector<16x16xf32>
    %10 = vector.broadcast %7 : vector<1x16xf32> to vector<16x16xf32>
    %11 = arith.subf %9, %10 : vector<16x16xf32>
    %c0_7 = arith.constant 0 : index
    %c0_8 = arith.constant 0 : index
    %c0_9 = arith.constant 0 : index
    %12 = vector.load %arg5[%c0_7, %c0_8, %c0_9] : memref<1x16x16xf32, #tpu.memory_space<vmem>>, vector<1x16x16xf32>
    %13 = vector.shape_cast %12 : vector<1x16x16xf32> to vector<16x16xf32>
    %14 = vector.shape_cast %11 : vector<16x16xf32> to vector<1x16x16xf32>
    tpu.vector_store %arg5[%c0_7, %c0_8, %c0_9], %14 {strides = array<i32>} : memref<1x16x16xf32, #tpu.memory_space<vmem>>, vector<1x16x16xf32>,
    return
  }
  func.func @transform_0(%arg0: i32, %arg1: i32, %arg2: i32) -> (i32, i32, i32) {
    %c0_i32 = arith.constant 0 : i32
    %c0_i32_0 = arith.constant 0 : i32
    return %arg0, %c0_i32, %arg1 : i32, i32, i32
  }
  func.func @transform_1(%arg0: i32, %arg1: i32, %arg2: i32) -> (i32, i32, i32) {
    %c0_i32 = arith.constant 0 : i32
    %c0_i32_0 = arith.constant 0 : i32
    return %arg0, %c0_i32, %arg2 : i32, i32, i32
  }
  func.func @transform_2(%arg0: i32, %arg1: i32, %arg2: i32) -> (i32, i32, i32) {
    %c0_i32 = arith.constant 0 : i32
    return %arg0, %arg1, %arg2 : i32, i32, i32
  }
}

module attributes {stable_mosaic.version = 11 : i64} {
  func.func @_edgeconv_kernel(%arg0: i32, %arg1: i32, %arg2: memref<1x8x16xi32, #tpu.memory_space<vmem>>, %arg3: memref<1x4x16xf32, #tpu.memory_space<vmem>>, %arg4: memref<1x4x16xf32, #tpu.memory_space<vmem>>, %arg5: memref<32x4xf32, #tpu.memory_space<vmem>>, %arg6: memref<32x4xf32, #tpu.memory_space<vmem>>, %arg7: memref<32x1xf32, #tpu.memory_space<vmem>>, %arg8: memref<1x32x16xf32, #tpu.memory_space<vmem>>, %arg9: memref<32x16xf32, #tpu.memory_space<vmem>>) attributes {dimension_semantics = [#tpu.dimension_semantics<parallel>, #tpu.dimension_semantics<arbitrary>], iteration_bounds = array<i64: 2, 1>, scalar_prefetch = 0 : i64, scratch_operands = 1 : i64, tpu.core_type = #tpu.core_type<tc>, window_params = [{transform_indices = @transform_0, window_bounds = array<i64: 1, 8, 16>}, {transform_indices = @transform_1, window_bounds = array<i64: 1, 4, 16>}, {transform_indices = @transform_2, window_bounds = array<i64: 1, 4, 16>}, {pipeline_mode = #tpu.pipeline_mode<synchronous>, transform_indices = @transform_3, window_bounds = array<i64: 32, 4>}, {pipeline_mode = #tpu.pipeline_mode<synchronous>, transform_indices = @transform_4, window_bounds = array<i64: 32, 4>}, {pipeline_mode = #tpu.pipeline_mode<synchronous>, transform_indices = @transform_5, window_bounds = array<i64: 32, 1>}, {transform_indices = @transform_6, window_bounds = array<i64: 1, 32, 16>}]} {
    %c0_i32 = arith.constant 0 : i32
    %0 = arith.cmpi eq, %arg1, %c0_i32 : i32
    %1 = arith.extui %0 : i1 to i32
    %c0_i32_0 = arith.constant 0 : i32
    %2 = arith.cmpi ne, %1, %c0_i32_0 : i32
    scf.if %2 {
      %c0_25 = arith.constant 0 : index
      %c0_26 = arith.constant 0 : index
      %78 = vector.load %arg5[%c0_25, %c0_26] : memref<32x4xf32, #tpu.memory_space<vmem>>, vector<32x4xf32>
      %c0_27 = arith.constant 0 : index
      %c0_28 = arith.constant 0 : index
      %c0_29 = arith.constant 0 : index
      %79 = vector.load %arg3[%c0_27, %c0_28, %c0_29] : memref<1x4x16xf32, #tpu.memory_space<vmem>>, vector<1x4x16xf32>
      %80 = vector.shape_cast %79 : vector<1x4x16xf32> to vector<4x16xf32>
      %cst_30 = arith.constant dense<0.000000e+00> : vector<32x16xf32>
      %81 = tpu.matmul %78, %80, %cst_30 {dimension_numbers = #tpu.dot_dimension_numbers<[1], [0], [0], [1], [0, 0, 1, 1], [], []>} : vector<32x4xf32>, vector<4x16xf32>, vector<32x16xf32> -> vector<32x16xf32>
      %c0_31 = arith.constant 0 : index
      %c0_32 = arith.constant 0 : index
      %82 = vector.load %arg9[%c0_31, %c0_32] : memref<32x16xf32, #tpu.memory_space<vmem>>, vector<32x16xf32>
      tpu.vector_store %arg9[%c0_31, %c0_32], %81 {strides = array<i32>} : memref<32x16xf32, #tpu.memory_space<vmem>>, vector<32x16xf32>,
    } else {
    }
    %c0 = arith.constant 0 : index
    %c0_1 = arith.constant 0 : index
    %c0_2 = arith.constant 0 : index
    %3 = vector.load %arg2[%c0, %c0_1, %c0_2] : memref<1x8x16xi32, #tpu.memory_space<vmem>>, vector<1x8x16xi32>
    %4 = vector.shape_cast %3 : vector<1x8x16xi32> to vector<8x16xi32>
    %c0_3 = arith.constant 0 : index
    %c0_4 = arith.constant 0 : index
    %5 = vector.load %arg6[%c0_3, %c0_4] : memref<32x4xf32, #tpu.memory_space<vmem>>, vector<32x4xf32>
    %c0_5 = arith.constant 0 : index
    %c0_6 = arith.constant 0 : index
    %c0_7 = arith.constant 0 : index
    %6 = vector.load %arg4[%c0_5, %c0_6, %c0_7] : memref<1x4x16xf32, #tpu.memory_space<vmem>>, vector<1x4x16xf32>
    %7 = vector.shape_cast %6 : vector<1x4x16xf32> to vector<4x16xf32>
    %cst = arith.constant dense<0.000000e+00> : vector<32x16xf32>
    %8 = tpu.matmul %5, %7, %cst {dimension_numbers = #tpu.dot_dimension_numbers<[1], [0], [0], [1], [0, 0, 1, 1], [], []>} : vector<32x4xf32>, vector<4x16xf32>, vector<32x16xf32> -> vector<32x16xf32>
    %c0_8 = arith.constant 0 : index
    %c0_9 = arith.constant 0 : index
    %9 = vector.load %arg7[%c0_8, %c0_9] : memref<32x1xf32, #tpu.memory_space<vmem>>, vector<32x1xf32>
    %10 = vector.broadcast %9 : vector<32x1xf32> to vector<32x16xf32>
    %11 = arith.addf %8, %10 : vector<32x16xf32>
    %c0_10 = arith.constant 0 : index
    %c0_11 = arith.constant 0 : index
    %12 = vector.load %arg9[%c0_10, %c0_11] : memref<32x16xf32, #tpu.memory_space<vmem>>, vector<32x16xf32>
    %13 = tpu.iota {dimensions = array<i32: 0>} : vector<16x16xi32>
    %14 = vector.extract_strided_slice %4 {offsets = [0, 0], sizes = [1, 16], strides = [1, 1]} : vector<8x16xi32> to vector<1x16xi32>
    %15 = vector.broadcast %14 : vector<1x16xi32> to vector<16x16xi32>
    %16 = arith.cmpi eq, %15, %13 : vector<16x16xi32>
    %17 = arith.extui %16 : vector<16x16xi1> to vector<16x16xi32>
    %18 = arith.sitofp %17 : vector<16x16xi32> to vector<16x16xf32>
    %cst_12 = arith.constant dense<0.000000e+00> : vector<32x16xf32>
    %19 = tpu.matmul %12, %18, %cst_12 {dimension_numbers = #tpu.dot_dimension_numbers<[1], [0], [0], [1], [0, 0, 1, 1], [], []>} : vector<32x16xf32>, vector<16x16xf32>, vector<32x16xf32> -> vector<32x16xf32>
    %20 = vector.extract_strided_slice %4 {offsets = [1, 0], sizes = [1, 16], strides = [1, 1]} : vector<8x16xi32> to vector<1x16xi32>
    %21 = vector.broadcast %20 : vector<1x16xi32> to vector<16x16xi32>
    %22 = arith.cmpi eq, %21, %13 : vector<16x16xi32>
    %23 = arith.extui %22 : vector<16x16xi1> to vector<16x16xi32>
    %24 = arith.sitofp %23 : vector<16x16xi32> to vector<16x16xf32>
    %cst_13 = arith.constant dense<0.000000e+00> : vector<32x16xf32>
    %25 = tpu.matmul %12, %24, %cst_13 {dimension_numbers = #tpu.dot_dimension_numbers<[1], [0], [0], [1], [0, 0, 1, 1], [], []>} : vector<32x16xf32>, vector<16x16xf32>, vector<32x16xf32> -> vector<32x16xf32>
    %26 = arith.maximumf %19, %25 : vector<32x16xf32>
    %27 = vector.extract_strided_slice %4 {offsets = [2, 0], sizes = [1, 16], strides = [1, 1]} : vector<8x16xi32> to vector<1x16xi32>
    %28 = vector.broadcast %27 : vector<1x16xi32> to vector<16x16xi32>
    %29 = arith.cmpi eq, %28, %13 : vector<16x16xi32>
    %30 = arith.extui %29 : vector<16x16xi1> to vector<16x16xi32>
    %31 = arith.sitofp %30 : vector<16x16xi32> to vector<16x16xf32>
    %cst_14 = arith.constant dense<0.000000e+00> : vector<32x16xf32>
    %32 = tpu.matmul %12, %31, %cst_14 {dimension_numbers = #tpu.dot_dimension_numbers<[1], [0], [0], [1], [0, 0, 1, 1], [], []>} : vector<32x16xf32>, vector<16x16xf32>, vector<32x16xf32> -> vector<32x16xf32>
    %33 = arith.maximumf %26, %32 : vector<32x16xf32>
    %34 = vector.extract_strided_slice %4 {offsets = [3, 0], sizes = [1, 16], strides = [1, 1]} : vector<8x16xi32> to vector<1x16xi32>
    %35 = vector.broadcast %34 : vector<1x16xi32> to vector<16x16xi32>
    %36 = arith.cmpi eq, %35, %13 : vector<16x16xi32>
    %37 = arith.extui %36 : vector<16x16xi1> to vector<16x16xi32>
    %38 = arith.sitofp %37 : vector<16x16xi32> to vector<16x16xf32>
    %cst_15 = arith.constant dense<0.000000e+00> : vector<32x16xf32>
    %39 = tpu.matmul %12, %38, %cst_15 {dimension_numbers = #tpu.dot_dimension_numbers<[1], [0], [0], [1], [0, 0, 1, 1], [], []>} : vector<32x16xf32>, vector<16x16xf32>, vector<32x16xf32> -> vector<32x16xf32>
    %40 = arith.maximumf %33, %39 : vector<32x16xf32>
    %41 = vector.extract_strided_slice %4 {offsets = [4, 0], sizes = [1, 16], strides = [1, 1]} : vector<8x16xi32> to vector<1x16xi32>
    %42 = vector.broadcast %41 : vector<1x16xi32> to vector<16x16xi32>
    %43 = arith.cmpi eq, %42, %13 : vector<16x16xi32>
    %44 = arith.extui %43 : vector<16x16xi1> to vector<16x16xi32>
    %45 = arith.sitofp %44 : vector<16x16xi32> to vector<16x16xf32>
    %cst_16 = arith.constant dense<0.000000e+00> : vector<32x16xf32>
    %46 = tpu.matmul %12, %45, %cst_16 {dimension_numbers = #tpu.dot_dimension_numbers<[1], [0], [0], [1], [0, 0, 1, 1], [], []>} : vector<32x16xf32>, vector<16x16xf32>, vector<32x16xf32> -> vector<32x16xf32>
    %47 = arith.maximumf %40, %46 : vector<32x16xf32>
    %48 = vector.extract_strided_slice %4 {offsets = [5, 0], sizes = [1, 16], strides = [1, 1]} : vector<8x16xi32> to vector<1x16xi32>
    %49 = vector.broadcast %48 : vector<1x16xi32> to vector<16x16xi32>
    %50 = arith.cmpi eq, %49, %13 : vector<16x16xi32>
    %51 = arith.extui %50 : vector<16x16xi1> to vector<16x16xi32>
    %52 = arith.sitofp %51 : vector<16x16xi32> to vector<16x16xf32>
    %cst_17 = arith.constant dense<0.000000e+00> : vector<32x16xf32>
    %53 = tpu.matmul %12, %52, %cst_17 {dimension_numbers = #tpu.dot_dimension_numbers<[1], [0], [0], [1], [0, 0, 1, 1], [], []>} : vector<32x16xf32>, vector<16x16xf32>, vector<32x16xf32> -> vector<32x16xf32>
    %54 = arith.maximumf %47, %53 : vector<32x16xf32>
    %55 = vector.extract_strided_slice %4 {offsets = [6, 0], sizes = [1, 16], strides = [1, 1]} : vector<8x16xi32> to vector<1x16xi32>
    %56 = vector.broadcast %55 : vector<1x16xi32> to vector<16x16xi32>
    %57 = arith.cmpi eq, %56, %13 : vector<16x16xi32>
    %58 = arith.extui %57 : vector<16x16xi1> to vector<16x16xi32>
    %59 = arith.sitofp %58 : vector<16x16xi32> to vector<16x16xf32>
    %cst_18 = arith.constant dense<0.000000e+00> : vector<32x16xf32>
    %60 = tpu.matmul %12, %59, %cst_18 {dimension_numbers = #tpu.dot_dimension_numbers<[1], [0], [0], [1], [0, 0, 1, 1], [], []>} : vector<32x16xf32>, vector<16x16xf32>, vector<32x16xf32> -> vector<32x16xf32>
    %61 = arith.maximumf %54, %60 : vector<32x16xf32>
    %62 = vector.extract_strided_slice %4 {offsets = [7, 0], sizes = [1, 16], strides = [1, 1]} : vector<8x16xi32> to vector<1x16xi32>
    %63 = vector.broadcast %62 : vector<1x16xi32> to vector<16x16xi32>
    %64 = arith.cmpi eq, %63, %13 : vector<16x16xi32>
    %65 = arith.extui %64 : vector<16x16xi1> to vector<16x16xi32>
    %66 = arith.sitofp %65 : vector<16x16xi32> to vector<16x16xf32>
    %cst_19 = arith.constant dense<0.000000e+00> : vector<32x16xf32>
    %67 = tpu.matmul %12, %66, %cst_19 {dimension_numbers = #tpu.dot_dimension_numbers<[1], [0], [0], [1], [0, 0, 1, 1], [], []>} : vector<32x16xf32>, vector<16x16xf32>, vector<32x16xf32> -> vector<32x16xf32>
    %68 = arith.maximumf %61, %67 : vector<32x16xf32>
    %69 = arith.addf %68, %11 : vector<32x16xf32>
    %cst_20 = arith.constant 0.000000e+00 : f32
    %70 = vector.broadcast %cst_20 : f32 to vector<32x16xf32>
    %71 = arith.cmpf oge, %69, %70 : vector<32x16xf32>
    %cst_21 = arith.constant 2.000000e-01 : f32
    %72 = vector.broadcast %cst_21 : f32 to vector<32x16xf32>
    %73 = arith.mulf %72, %69 : vector<32x16xf32>
    %74 = arith.select %71, %69, %73 : vector<32x16xi1>, vector<32x16xf32>
    %c0_22 = arith.constant 0 : index
    %c0_23 = arith.constant 0 : index
    %c0_24 = arith.constant 0 : index
    %75 = vector.load %arg8[%c0_22, %c0_23, %c0_24] : memref<1x32x16xf32, #tpu.memory_space<vmem>>, vector<1x32x16xf32>
    %76 = vector.shape_cast %75 : vector<1x32x16xf32> to vector<32x16xf32>
    %77 = vector.shape_cast %74 : vector<32x16xf32> to vector<1x32x16xf32>
    tpu.vector_store %arg8[%c0_22, %c0_23, %c0_24], %77 {strides = array<i32>} : memref<1x32x16xf32, #tpu.memory_space<vmem>>, vector<1x32x16xf32>,
    return
  }
  func.func @transform_0(%arg0: i32, %arg1: i32) -> (i32, i32, i32) {
    %c0_i32 = arith.constant 0 : i32
    %c0_i32_0 = arith.constant 0 : i32
    return %arg0, %c0_i32, %arg1 : i32, i32, i32
  }
  func.func @transform_1(%arg0: i32, %arg1: i32) -> (i32, i32, i32) {
    %c0_i32 = arith.constant 0 : i32
    %c0_i32_0 = arith.constant 0 : i32
    %c0_i32_1 = arith.constant 0 : i32
    return %arg0, %c0_i32, %c0_i32_0 : i32, i32, i32
  }
  func.func @transform_2(%arg0: i32, %arg1: i32) -> (i32, i32, i32) {
    %c0_i32 = arith.constant 0 : i32
    %c0_i32_0 = arith.constant 0 : i32
    return %arg0, %c0_i32, %arg1 : i32, i32, i32
  }
  func.func @transform_3(%arg0: i32, %arg1: i32) -> (i32, i32) {
    %c0_i32 = arith.constant 0 : i32
    %c0_i32_0 = arith.constant 0 : i32
    %c0_i32_1 = arith.constant 0 : i32
    return %c0_i32, %c0_i32_0 : i32, i32
  }
  func.func @transform_4(%arg0: i32, %arg1: i32) -> (i32, i32) {
    %c0_i32 = arith.constant 0 : i32
    %c0_i32_0 = arith.constant 0 : i32
    %c0_i32_1 = arith.constant 0 : i32
    return %c0_i32, %c0_i32_0 : i32, i32
  }
  func.func @transform_5(%arg0: i32, %arg1: i32) -> (i32, i32) {
    %c0_i32 = arith.constant 0 : i32
    %c0_i32_0 = arith.constant 0 : i32
    %c0_i32_1 = arith.constant 0 : i32
    return %c0_i32, %c0_i32_0 : i32, i32
  }
  func.func @transform_6(%arg0: i32, %arg1: i32) -> (i32, i32, i32) {
    %c0_i32 = arith.constant 0 : i32
    %c0_i32_0 = arith.constant 0 : i32
    return %arg0, %c0_i32, %arg1 : i32, i32, i32
  }
}

module attributes {stable_mosaic.version = 11 : i64} {
  func.func @_edgeconv_kernel(%arg0: i32, %arg1: i32, %arg2: memref<1x8x16xi32, #tpu.memory_space<vmem>>, %arg3: memref<1x32x16xf32, #tpu.memory_space<vmem>>, %arg4: memref<1x32x16xf32, #tpu.memory_space<vmem>>, %arg5: memref<32x32xf32, #tpu.memory_space<vmem>>, %arg6: memref<32x32xf32, #tpu.memory_space<vmem>>, %arg7: memref<32x1xf32, #tpu.memory_space<vmem>>, %arg8: memref<1x32x16xf32, #tpu.memory_space<vmem>>, %arg9: memref<32x16xf32, #tpu.memory_space<vmem>>) attributes {dimension_semantics = [#tpu.dimension_semantics<parallel>, #tpu.dimension_semantics<arbitrary>], iteration_bounds = array<i64: 2, 1>, scalar_prefetch = 0 : i64, scratch_operands = 1 : i64, tpu.core_type = #tpu.core_type<tc>, window_params = [{transform_indices = @transform_0, window_bounds = array<i64: 1, 8, 16>}, {transform_indices = @transform_1, window_bounds = array<i64: 1, 32, 16>}, {transform_indices = @transform_2, window_bounds = array<i64: 1, 32, 16>}, {pipeline_mode = #tpu.pipeline_mode<synchronous>, transform_indices = @transform_3, window_bounds = array<i64: 32, 32>}, {pipeline_mode = #tpu.pipeline_mode<synchronous>, transform_indices = @transform_4, window_bounds = array<i64: 32, 32>}, {pipeline_mode = #tpu.pipeline_mode<synchronous>, transform_indices = @transform_5, window_bounds = array<i64: 32, 1>}, {transform_indices = @transform_6, window_bounds = array<i64: 1, 32, 16>}]} {
    %c0_i32 = arith.constant 0 : i32
    %0 = arith.cmpi eq, %arg1, %c0_i32 : i32
    %1 = arith.extui %0 : i1 to i32
    %c0_i32_0 = arith.constant 0 : i32
    %2 = arith.cmpi ne, %1, %c0_i32_0 : i32
    scf.if %2 {
      %c0_25 = arith.constant 0 : index
      %c0_26 = arith.constant 0 : index
      %78 = vector.load %arg5[%c0_25, %c0_26] : memref<32x32xf32, #tpu.memory_space<vmem>>, vector<32x32xf32>
      %c0_27 = arith.constant 0 : index
      %c0_28 = arith.constant 0 : index
      %c0_29 = arith.constant 0 : index
      %79 = vector.load %arg3[%c0_27, %c0_28, %c0_29] : memref<1x32x16xf32, #tpu.memory_space<vmem>>, vector<1x32x16xf32>
      %80 = vector.shape_cast %79 : vector<1x32x16xf32> to vector<32x16xf32>
      %cst_30 = arith.constant dense<0.000000e+00> : vector<32x16xf32>
      %81 = tpu.matmul %78, %80, %cst_30 {dimension_numbers = #tpu.dot_dimension_numbers<[1], [0], [0], [1], [0, 0, 1, 1], [], []>} : vector<32x32xf32>, vector<32x16xf32>, vector<32x16xf32> -> vector<32x16xf32>
      %c0_31 = arith.constant 0 : index
      %c0_32 = arith.constant 0 : index
      %82 = vector.load %arg9[%c0_31, %c0_32] : memref<32x16xf32, #tpu.memory_space<vmem>>, vector<32x16xf32>
      tpu.vector_store %arg9[%c0_31, %c0_32], %81 {strides = array<i32>} : memref<32x16xf32, #tpu.memory_space<vmem>>, vector<32x16xf32>,
    } else {
    }
    %c0 = arith.constant 0 : index
    %c0_1 = arith.constant 0 : index
    %c0_2 = arith.constant 0 : index
    %3 = vector.load %arg2[%c0, %c0_1, %c0_2] : memref<1x8x16xi32, #tpu.memory_space<vmem>>, vector<1x8x16xi32>
    %4 = vector.shape_cast %3 : vector<1x8x16xi32> to vector<8x16xi32>
    %c0_3 = arith.constant 0 : index
    %c0_4 = arith.constant 0 : index
    %5 = vector.load %arg6[%c0_3, %c0_4] : memref<32x32xf32, #tpu.memory_space<vmem>>, vector<32x32xf32>
    %c0_5 = arith.constant 0 : index
    %c0_6 = arith.constant 0 : index
    %c0_7 = arith.constant 0 : index
    %6 = vector.load %arg4[%c0_5, %c0_6, %c0_7] : memref<1x32x16xf32, #tpu.memory_space<vmem>>, vector<1x32x16xf32>
    %7 = vector.shape_cast %6 : vector<1x32x16xf32> to vector<32x16xf32>
    %cst = arith.constant dense<0.000000e+00> : vector<32x16xf32>
    %8 = tpu.matmul %5, %7, %cst {dimension_numbers = #tpu.dot_dimension_numbers<[1], [0], [0], [1], [0, 0, 1, 1], [], []>} : vector<32x32xf32>, vector<32x16xf32>, vector<32x16xf32> -> vector<32x16xf32>
    %c0_8 = arith.constant 0 : index
    %c0_9 = arith.constant 0 : index
    %9 = vector.load %arg7[%c0_8, %c0_9] : memref<32x1xf32, #tpu.memory_space<vmem>>, vector<32x1xf32>
    %10 = vector.broadcast %9 : vector<32x1xf32> to vector<32x16xf32>
    %11 = arith.addf %8, %10 : vector<32x16xf32>
    %c0_10 = arith.constant 0 : index
    %c0_11 = arith.constant 0 : index
    %12 = vector.load %arg9[%c0_10, %c0_11] : memref<32x16xf32, #tpu.memory_space<vmem>>, vector<32x16xf32>
    %13 = tpu.iota {dimensions = array<i32: 0>} : vector<16x16xi32>
    %14 = vector.extract_strided_slice %4 {offsets = [0, 0], sizes = [1, 16], strides = [1, 1]} : vector<8x16xi32> to vector<1x16xi32>
    %15 = vector.broadcast %14 : vector<1x16xi32> to vector<16x16xi32>
    %16 = arith.cmpi eq, %15, %13 : vector<16x16xi32>
    %17 = arith.extui %16 : vector<16x16xi1> to vector<16x16xi32>
    %18 = arith.sitofp %17 : vector<16x16xi32> to vector<16x16xf32>
    %cst_12 = arith.constant dense<0.000000e+00> : vector<32x16xf32>
    %19 = tpu.matmul %12, %18, %cst_12 {dimension_numbers = #tpu.dot_dimension_numbers<[1], [0], [0], [1], [0, 0, 1, 1], [], []>} : vector<32x16xf32>, vector<16x16xf32>, vector<32x16xf32> -> vector<32x16xf32>
    %20 = vector.extract_strided_slice %4 {offsets = [1, 0], sizes = [1, 16], strides = [1, 1]} : vector<8x16xi32> to vector<1x16xi32>
    %21 = vector.broadcast %20 : vector<1x16xi32> to vector<16x16xi32>
    %22 = arith.cmpi eq, %21, %13 : vector<16x16xi32>
    %23 = arith.extui %22 : vector<16x16xi1> to vector<16x16xi32>
    %24 = arith.sitofp %23 : vector<16x16xi32> to vector<16x16xf32>
    %cst_13 = arith.constant dense<0.000000e+00> : vector<32x16xf32>
    %25 = tpu.matmul %12, %24, %cst_13 {dimension_numbers = #tpu.dot_dimension_numbers<[1], [0], [0], [1], [0, 0, 1, 1], [], []>} : vector<32x16xf32>, vector<16x16xf32>, vector<32x16xf32> -> vector<32x16xf32>
    %26 = arith.maximumf %19, %25 : vector<32x16xf32>
    %27 = vector.extract_strided_slice %4 {offsets = [2, 0], sizes = [1, 16], strides = [1, 1]} : vector<8x16xi32> to vector<1x16xi32>
    %28 = vector.broadcast %27 : vector<1x16xi32> to vector<16x16xi32>
    %29 = arith.cmpi eq, %28, %13 : vector<16x16xi32>
    %30 = arith.extui %29 : vector<16x16xi1> to vector<16x16xi32>
    %31 = arith.sitofp %30 : vector<16x16xi32> to vector<16x16xf32>
    %cst_14 = arith.constant dense<0.000000e+00> : vector<32x16xf32>
    %32 = tpu.matmul %12, %31, %cst_14 {dimension_numbers = #tpu.dot_dimension_numbers<[1], [0], [0], [1], [0, 0, 1, 1], [], []>} : vector<32x16xf32>, vector<16x16xf32>, vector<32x16xf32> -> vector<32x16xf32>
    %33 = arith.maximumf %26, %32 : vector<32x16xf32>
    %34 = vector.extract_strided_slice %4 {offsets = [3, 0], sizes = [1, 16], strides = [1, 1]} : vector<8x16xi32> to vector<1x16xi32>
    %35 = vector.broadcast %34 : vector<1x16xi32> to vector<16x16xi32>
    %36 = arith.cmpi eq, %35, %13 : vector<16x16xi32>
    %37 = arith.extui %36 : vector<16x16xi1> to vector<16x16xi32>
    %38 = arith.sitofp %37 : vector<16x16xi32> to vector<16x16xf32>
    %cst_15 = arith.constant dense<0.000000e+00> : vector<32x16xf32>
    %39 = tpu.matmul %12, %38, %cst_15 {dimension_numbers = #tpu.dot_dimension_numbers<[1], [0], [0], [1], [0, 0, 1, 1], [], []>} : vector<32x16xf32>, vector<16x16xf32>, vector<32x16xf32> -> vector<32x16xf32>
    %40 = arith.maximumf %33, %39 : vector<32x16xf32>
    %41 = vector.extract_strided_slice %4 {offsets = [4, 0], sizes = [1, 16], strides = [1, 1]} : vector<8x16xi32> to vector<1x16xi32>
    %42 = vector.broadcast %41 : vector<1x16xi32> to vector<16x16xi32>
    %43 = arith.cmpi eq, %42, %13 : vector<16x16xi32>
    %44 = arith.extui %43 : vector<16x16xi1> to vector<16x16xi32>
    %45 = arith.sitofp %44 : vector<16x16xi32> to vector<16x16xf32>
    %cst_16 = arith.constant dense<0.000000e+00> : vector<32x16xf32>
    %46 = tpu.matmul %12, %45, %cst_16 {dimension_numbers = #tpu.dot_dimension_numbers<[1], [0], [0], [1], [0, 0, 1, 1], [], []>} : vector<32x16xf32>, vector<16x16xf32>, vector<32x16xf32> -> vector<32x16xf32>
    %47 = arith.maximumf %40, %46 : vector<32x16xf32>
    %48 = vector.extract_strided_slice %4 {offsets = [5, 0], sizes = [1, 16], strides = [1, 1]} : vector<8x16xi32> to vector<1x16xi32>
    %49 = vector.broadcast %48 : vector<1x16xi32> to vector<16x16xi32>
    %50 = arith.cmpi eq, %49, %13 : vector<16x16xi32>
    %51 = arith.extui %50 : vector<16x16xi1> to vector<16x16xi32>
    %52 = arith.sitofp %51 : vector<16x16xi32> to vector<16x16xf32>
    %cst_17 = arith.constant dense<0.000000e+00> : vector<32x16xf32>
    %53 = tpu.matmul %12, %52, %cst_17 {dimension_numbers = #tpu.dot_dimension_numbers<[1], [0], [0], [1], [0, 0, 1, 1], [], []>} : vector<32x16xf32>, vector<16x16xf32>, vector<32x16xf32> -> vector<32x16xf32>
    %54 = arith.maximumf %47, %53 : vector<32x16xf32>
    %55 = vector.extract_strided_slice %4 {offsets = [6, 0], sizes = [1, 16], strides = [1, 1]} : vector<8x16xi32> to vector<1x16xi32>
    %56 = vector.broadcast %55 : vector<1x16xi32> to vector<16x16xi32>
    %57 = arith.cmpi eq, %56, %13 : vector<16x16xi32>
    %58 = arith.extui %57 : vector<16x16xi1> to vector<16x16xi32>
    %59 = arith.sitofp %58 : vector<16x16xi32> to vector<16x16xf32>
    %cst_18 = arith.constant dense<0.000000e+00> : vector<32x16xf32>
    %60 = tpu.matmul %12, %59, %cst_18 {dimension_numbers = #tpu.dot_dimension_numbers<[1], [0], [0], [1], [0, 0, 1, 1], [], []>} : vector<32x16xf32>, vector<16x16xf32>, vector<32x16xf32> -> vector<32x16xf32>
    %61 = arith.maximumf %54, %60 : vector<32x16xf32>
    %62 = vector.extract_strided_slice %4 {offsets = [7, 0], sizes = [1, 16], strides = [1, 1]} : vector<8x16xi32> to vector<1x16xi32>
    %63 = vector.broadcast %62 : vector<1x16xi32> to vector<16x16xi32>
    %64 = arith.cmpi eq, %63, %13 : vector<16x16xi32>
    %65 = arith.extui %64 : vector<16x16xi1> to vector<16x16xi32>
    %66 = arith.sitofp %65 : vector<16x16xi32> to vector<16x16xf32>
    %cst_19 = arith.constant dense<0.000000e+00> : vector<32x16xf32>
    %67 = tpu.matmul %12, %66, %cst_19 {dimension_numbers = #tpu.dot_dimension_numbers<[1], [0], [0], [1], [0, 0, 1, 1], [], []>} : vector<32x16xf32>, vector<16x16xf32>, vector<32x16xf32> -> vector<32x16xf32>
    %68 = arith.maximumf %61, %67 : vector<32x16xf32>
    %69 = arith.addf %68, %11 : vector<32x16xf32>
    %cst_20 = arith.constant 0.000000e+00 : f32
    %70 = vector.broadcast %cst_20 : f32 to vector<32x16xf32>
    %71 = arith.cmpf oge, %69, %70 : vector<32x16xf32>
    %cst_21 = arith.constant 2.000000e-01 : f32
    %72 = vector.broadcast %cst_21 : f32 to vector<32x16xf32>
    %73 = arith.mulf %72, %69 : vector<32x16xf32>
    %74 = arith.select %71, %69, %73 : vector<32x16xi1>, vector<32x16xf32>
    %c0_22 = arith.constant 0 : index
    %c0_23 = arith.constant 0 : index
    %c0_24 = arith.constant 0 : index
    %75 = vector.load %arg8[%c0_22, %c0_23, %c0_24] : memref<1x32x16xf32, #tpu.memory_space<vmem>>, vector<1x32x16xf32>
    %76 = vector.shape_cast %75 : vector<1x32x16xf32> to vector<32x16xf32>
    %77 = vector.shape_cast %74 : vector<32x16xf32> to vector<1x32x16xf32>
    tpu.vector_store %arg8[%c0_22, %c0_23, %c0_24], %77 {strides = array<i32>} : memref<1x32x16xf32, #tpu.memory_space<vmem>>, vector<1x32x16xf32>,
    return
  }
  func.func @transform_0(%arg0: i32, %arg1: i32) -> (i32, i32, i32) {
    %c0_i32 = arith.constant 0 : i32
    %c0_i32_0 = arith.constant 0 : i32
    return %arg0, %c0_i32, %arg1 : i32, i32, i32
  }
  func.func @transform_1(%arg0: i32, %arg1: i32) -> (i32, i32, i32) {
    %c0_i32 = arith.constant 0 : i32
    %c0_i32_0 = arith.constant 0 : i32
    %c0_i32_1 = arith.constant 0 : i32
    return %arg0, %c0_i32, %c0_i32_0 : i32, i32, i32
  }
  func.func @transform_2(%arg0: i32, %arg1: i32) -> (i32, i32, i32) {
    %c0_i32 = arith.constant 0 : i32
    %c0_i32_0 = arith.constant 0 : i32
    return %arg0, %c0_i32, %arg1 : i32, i32, i32
  }
  func.func @transform_3(%arg0: i32, %arg1: i32) -> (i32, i32) {
    %c0_i32 = arith.constant 0 : i32
    %c0_i32_0 = arith.constant 0 : i32
    %c0_i32_1 = arith.constant 0 : i32
    return %c0_i32, %c0_i32_0 : i32, i32
  }
  func.func @transform_4(%arg0: i32, %arg1: i32) -> (i32, i32) {
    %c0_i32 = arith.constant 0 : i32
    %c0_i32_0 = arith.constant 0 : i32
    %c0_i32_1 = arith.constant 0 : i32
    return %c0_i32, %c0_i32_0 : i32, i32
  }
  func.func @transform_5(%arg0: i32, %arg1: i32) -> (i32, i32) {
    %c0_i32 = arith.constant 0 : i32
    %c0_i32_0 = arith.constant 0 : i32
    %c0_i32_1 = arith.constant 0 : i32
    return %c0_i32, %c0_i32_0 : i32, i32
  }
  func.func @transform_6(%arg0: i32, %arg1: i32) -> (i32, i32, i32) {
    %c0_i32 = arith.constant 0 : i32
    %c0_i32_0 = arith.constant 0 : i32
    return %arg0, %c0_i32, %arg1 : i32, i32, i32
  }
}

</mosaic_0001>

<llo_original>
// kernel: local_embedder_forward.6
$region0: #{local_embedder_forward.6}
  #allocation0 [shape = 'u32[]', space=smem, size = 0x4, offset = 0x4, fixed_abs, tag = 'smem constant byte address 0x4 - core index']
  #allocation1 [shape = 'u32[72,128]{1,0:T(1,128)}', space=vmem, size = 0x9000, scoped, tag = 'internal scratch']
  %s0 = inlined_call_operand.vmem [shape: f32[2,32,16], index: 0, kind: input, shape index: {}, may-alias: {0,1}]
  %s1 = inlined_call_operand.vmem [shape: f32[2,32,16], index: 1, kind: input, shape index: {}, may-alias: {0,1}]
  %s2 = inlined_call_operand.vmem [shape: f32[2,16,16], index: 2, kind: output, shape index: {}]
  %s3 = sld [smem:[#allocation0]]
  $region41: #{local_embedder_forward.6} parent=0
    _
  %s5 = ssub.s32 1, %s3
  %s6 = scalar_select 0, %s5, %s3
  loop: start=0, step=1, limit=4
  $region2: #{local_embedder_forward.6} parent=0 // loop_pre_header
    _
  $region3: #{local_embedder_forward.6} parent=0 // loop_header
    %s8 = sphi 0, %s12
    %p9 = scmp.ge.s32.totalorder %s8, 4
    %s15 = sphi 0, %s34
    %s16 = sphi 0, %s30
    %s17 = sphi 0, %s26
    %s18 = sphi 0, %s15
    %s19 = sphi 0, %s16
    %s20 = sphi 0, %s17
    %s21 = sphi 0, %s18
    %s22 = sphi 0, %s19
    %s23 = sphi 0, %s20
    %s39 = sphi 0, %s41
    %s42 = sphi 0, %s39
    %s43 = sphi 0, %s42
    %s59 = sphi 0, %s43
    %s67 = sphi 0, %s69
    %s70 = sphi 0, %s67
    %s71 = sphi 0, %s70
    %s87 = sphi 0, %s71
    %s97 = sphi 0, %s99
    %s100 = sphi 0, %s97
    %s101 = sphi 0, %s100
    %s117 = sphi 0, %s101
  $region4: #{local_embedder_forward.6} parent=0 // loop_header_branch
    %11 = sbr.rel (%p9) target = $region8
  $region5: #{local_embedder_forward.6} parent=0 // loop_body
    %s13 = ssub.s32 %s8, 1
    %s14 = ssub.s32 %s8, 2
    %s24 = sadd.s32 1, %s17
    %p25 = scmp.ge.s32.totalorder %s24, 1
    %s26 = scalar_select %p25, 0, %s24
    %s27 = sadd.s32 1, %s16
    %s28 = scalar_select %p25, %s27, %s16
    %p29 = scmp.ge.s32.totalorder %s28, 1
    %s30 = scalar_select %p29, 0, %s28
    %s31 = sadd.s32 1, %s15
    %s32 = scalar_select %p29, %s31, %s15
    %p33 = scmp.ge.s32.totalorder %s32, 2
    %s34 = scalar_select %p33, 0, %s32
    %s35 = ssub.s32 %s15, %s34
    %s36 = ssub.s32 %s16, %s30
    %s37 = sor.u32 %s35, %s36
    %p38 = scmp.eq.s32.totalorder %s37, 0
    %s40 = sadd.s32 %s39, 1
    %s41 = scalar_select %p38, %s39, %s40
    %p44 = pneg %p38
    %p45 = scmp.eq.s32.totalorder %s8, 1
    %p46 = por %p44, %p45
    %p47 = scmp.ne.s32.totalorder %s39, %s42
    %p48 = scmp.eq.s32.totalorder %s8, 0
    %p49 = por %p47, %p48
    %p50 = scmp.ne.s32.totalorder %s39, %s42
    %p51 = scmp.eq.s32.totalorder %s13, 1
    %p52 = por %p50, %p51
    %p53 = scmp.ne.s32.totalorder %s42, %s43
    %p54 = scmp.eq.s32.totalorder %s13, 0
    %p55 = por %p53, %p54
    %p56 = scmp.ne.s32.totalorder %s42, %s43
    %p57 = scmp.eq.s32.totalorder %s14, 1
    %p58 = por %p56, %p57
    %p60 = scmp.ne.s32.totalorder %s43, %s59
    %p61 = scmp.eq.s32.totalorder %s14, 0
    %p62 = por %p60, %p61
    %s63 = ssub.s32 %s15, %s34
    %s64 = ssub.s32 %s17, %s26
    %s65 = sor.u32 %s63, %s64
    %p66 = scmp.eq.s32.totalorder %s65, 0
    %s68 = sadd.s32 %s67, 1
    %s69 = scalar_select %p66, %s67, %s68
    %p72 = pneg %p66
    %p73 = scmp.eq.s32.totalorder %s8, 1
    %p74 = por %p72, %p73
    %p75 = scmp.ne.s32.totalorder %s67, %s70
    %p76 = scmp.eq.s32.totalorder %s8, 0
    %p77 = por %p75, %p76
    %p78 = scmp.ne.s32.totalorder %s67, %s70
    %p79 = scmp.eq.s32.totalorder %s13, 1
    %p80 = por %p78, %p79
    %p81 = scmp.ne.s32.totalorder %s70, %s71
    %p82 = scmp.eq.s32.totalorder %s13, 0
    %p83 = por %p81, %p82
    %p84 = scmp.ne.s32.totalorder %s70, %s71
    %p85 = scmp.eq.s32.totalorder %s14, 1
    %p86 = por %p84, %p85
    %p88 = scmp.ne.s32.totalorder %s71, %s87
    %p89 = scmp.eq.s32.totalorder %s14, 0
    %p90 = por %p88, %p89
    %s91 = ssub.s32 %s15, %s34
    %s92 = ssub.s32 %s16, %s30
    %s93 = sor.u32 %s91, %s92
    %s94 = ssub.s32 %s17, %s26
    %s95 = sor.u32 %s93, %s94
    %p96 = scmp.eq.s32.totalorder %s95, 0
    %s98 = sadd.s32 %s97, 1
    %s99 = scalar_select %p96, %s97, %s98
    %p102 = pneg %p96
    %p103 = scmp.eq.s32.totalorder %s8, 1
    %p104 = por %p102, %p103
    %p105 = scmp.ne.s32.totalorder %s97, %s100
    %p106 = scmp.eq.s32.totalorder %s8, 0
    %p107 = por %p105, %p106
    %p108 = scmp.ne.s32.totalorder %s97, %s100
    %p109 = scmp.eq.s32.totalorder %s13, 1
    %p110 = por %p108, %p109
    %p111 = scmp.ne.s32.totalorder %s100, %s101
    %p112 = scmp.eq.s32.totalorder %s13, 0
    %p113 = por %p111, %p112
    %p114 = scmp.ne.s32.totalorder %s100, %s101
    %p115 = scmp.eq.s32.totalorder %s14, 1
    %p116 = por %p114, %p115
    %p118 = scmp.ne.s32.totalorder %s101, %s117
    %p119 = scmp.eq.s32.totalorder %s14, 0
    %p120 = por %p118, %p119
    %p121 = scmp.le.s32.totalorder 1, %s8
    %p122 = scmp.lt.s32.totalorder %s8, 3
    %p123 = pnand %p121, %p122
    %p124 = pneg %p123
    // Predicated region
    $region9: #{local_embedder_forward.6} parent=5 // pred_check
      _
    $region10: #{local_embedder_forward.6} parent=5 // pred_check_branch
      %126 = sbr.rel (%p123) target = $region12
    $region11: #{local_embedder_forward.6} parent=5 // pred_region
      %s127 = ssub.s32 %s8, 1
    $region12: #{local_embedder_forward.6} parent=5 // pred_fallthru
      _
    %p128 = scmp.lt.s32.totalorder %s8, 2
    // Predicated region
    $region13: #{local_embedder_forward.6} parent=5 // pred_check
      %p129 = pneg %p128
    $region14: #{local_embedder_forward.6} parent=5 // pred_check_branch
      %131 = sbr.rel (%p129) target = $region16
    $region15: #{local_embedder_forward.6} parent=5 // pred_region
      // Predicated region
      $region17: #{local_embedder_forward.6} parent=15 // pred_check
        %p132 = pneg %p49
      $region18: #{local_embedder_forward.6} parent=15 // pred_check_branch
        %134 = sbr.rel (%p132) target = $region20
      $region19: #{local_embedder_forward.6} parent=15 // pred_region
        %p135 = scmp.lt.s32.totalorder %s15, 1
        %s136 = scalar_select %p135, %s15, 1
        %p137 = scmp.lt.s32.totalorder %s16, 0
        %s138 = scalar_select %p137, %s16, 0
        %s139 = smul.addr %s136, 4
        %s140 = sadd.s32 %s138, %s139
        %s141 = smul.addr %s140, 8
        %s142 = scalar_lea.vmem %s0, %s141
      $region20: #{local_embedder_forward.6} parent=15 // pred_fallthru
        _
      // Predicated region
      $region21: #{local_embedder_forward.6} parent=15 // pred_check
        %p143 = pneg %p77
      $region22: #{local_embedder_forward.6} parent=15 // pred_check_branch
        %145 = sbr.rel (%p143) target = $region24
      $region23: #{local_embedder_forward.6} parent=15 // pred_region
        %p146 = scmp.lt.s32.totalorder %s15, 1
        %s147 = scalar_select %p146, %s15, 1
        %p148 = scmp.lt.s32.totalorder %s17, 0
        %s149 = scalar_select %p148, %s17, 0
        %s150 = smul.addr %s147, 4
        %s151 = sadd.s32 %s149, %s150
        %s152 = smul.addr %s151, 8
        %s153 = scalar_lea.vmem %s1, %s152
      $region24: #{local_embedder_forward.6} parent=15 // pred_fallthru
        _
    $region16: #{local_embedder_forward.6} parent=5 // pred_fallthru
      _
    %p154 = scmp.le.s32.totalorder 1, %s8
    %p155 = scmp.lt.s32.totalorder %s8, 3
    %p156 = pnand %p154, %p155
    %p157 = pneg %p156
    // Predicated region
    $region25: #{local_embedder_forward.6} parent=5 // pred_check
      _
    $region26: #{local_embedder_forward.6} parent=5 // pred_check_branch
      %159 = sbr.rel (%p156) target = $region28
    $region27: #{local_embedder_forward.6} parent=5 // pred_region
      %s160 = ssub.s32 %s8, 1
      %p161 = scmp.lt.s32.totalorder %s18, 1
      %s162 = scalar_select %p161, %s18, 1
      %p163 = scmp.lt.s32.totalorder %s19, 0
      %s164 = scalar_select %p163, %s19, 0
      %s165 = smul.addr %s162, 4
      %s166 = sadd.s32 %s164, %s165
      %s167 = smul.addr %s166, 8
      %s168 = scalar_lea.vmem %s0, %s167
      %p169 = pneg %p55
      %p170 = pneg %p52
      %p171 = scmp.lt.s32.totalorder %s18, 1
      %s172 = scalar_select %p171, %s18, 1
      %p173 = scmp.lt.s32.totalorder %s20, 0
      %s174 = scalar_select %p173, %s20, 0
      %s175 = smul.addr %s172, 4
      %s176 = sadd.s32 %s174, %s175
      %s177 = smul.addr %s176, 8
      %s178 = scalar_lea.vmem %s1, %s177
      %p179 = pneg %p83
      %p180 = pneg %p80
      %p181 = pneg %p113
      %p182 = pneg %p110
      %s183 = smul.u32 2, %s19
      %p184 = scmp.lt.s32.totalorder %s18, 1
      %s185 = scalar_select %p184, %s18, 1
      %p186 = scmp.lt.s32.totalorder %s183, 1
      %s187 = scalar_select %p186, %s183, 1
      %p188 = scmp.lt.s32.totalorder %s20, 0
      %s189 = scalar_select %p188, %s20, 0
      %s190 = sadd.s32 %s189, %s187
      %s191 = smul.addr %s185, 2
      %s192 = sadd.s32 %s190, %s191
      %s193 = smul.addr %s192, 8
      %s194 = scalar_lea.vmem %s2, %s193
      %p195 = scmp.lt.s32.totalorder %s18, 1
      %s196 = scalar_select %p195, %s18, 1
      %p197 = scmp.lt.s32.totalorder %s19, 0
      %s198 = scalar_select %p197, %s19, 0
      %s199 = smul.addr %s196, 4
      %s200 = sadd.s32 %s198, %s199
      %s201 = smul.addr %s200, 8
      %s202 = scalar_lea.vmem %s0, %s201
      %p203 = scmp.lt.s32.totalorder %s18, 1
      %s204 = scalar_select %p203, %s18, 1
      %p205 = scmp.lt.s32.totalorder %s20, 0
      %s206 = scalar_select %p205, %s20, 0
      %s207 = smul.addr %s204, 4
      %s208 = sadd.s32 %s206, %s207
      %s209 = smul.addr %s208, 8
      %s210 = scalar_lea.vmem %s1, %s209
      %s211 = smul.u32 2, %s19
      %p212 = scmp.lt.s32.totalorder %s18, 1
      %s213 = scalar_select %p212, %s18, 1
      %p214 = scmp.lt.s32.totalorder %s211, 1
      %s215 = scalar_select %p214, %s211, 1
      %p216 = scmp.lt.s32.totalorder %s20, 0
      %s217 = scalar_select %p216, %s20, 0
      %s218 = sadd.s32 %s217, %s215
      %s219 = smul.addr %s213, 2
      %s220 = sadd.s32 %s218, %s219
      %s221 = smul.addr %s220, 8
      %s222 = scalar_lea.vmem %s2, %s221
      %s223 = smul.u32 2, %s19
      %v224 = vld [vmem:[%s202] sm:$0xff]
      %v225 = vld [vmem:[%s202 + $0x8] sm:$0xff]
      %v226 = vld [vmem:[%s202 + $0x10] sm:$0xff]
      %v227 = vld [vmem:[%s202 + $0x18] sm:$0xff]
      %v228 = vld [vmem:[%s210] sm:$0xff]
      %v229 = vld [vmem:[%s210 + $0x8] sm:$0xff]
      %v230 = vld [vmem:[%s210 + $0x10] sm:$0xff]
      %v231 = vld [vmem:[%s210 + $0x18] sm:$0xff]
      %232 = vxpose.xlu0.b32.start [1/16] %v224, 128
      %233 = vxpose.xlu0.b32.cont [2/16] %v225, 128
      %234 = vxpose.xlu0.b32.cont [3/16] %v226, 128
      %235 = vxpose.xlu0.b32.cont [4/16] %v227, 128
      %236 = vxpose.xlu0.b32.cont [5/16] 0.0, 128
      %237 = vxpose.xlu0.b32.cont [6/16] 0.0, 128
      %238 = vxpose.xlu0.b32.cont [7/16] 0.0, 128
      %239 = vxpose.xlu0.b32.cont [8/16] 0.0, 128
      %240 = vxpose.xlu0.b32.cont [9/16] 0.0, 128
      %241 = vxpose.xlu0.b32.cont [10/16] 0.0, 128
      %242 = vxpose.xlu0.b32.cont [11/16] 0.0, 128
      %243 = vxpose.xlu0.b32.cont [12/16] 0.0, 128
      %244 = vxpose.xlu0.b32.cont [13/16] 0.0, 128
      %245 = vxpose.xlu0.b32.cont [14/16] 0.0, 128
      %246 = vxpose.xlu0.b32.cont [15/16] 0.0, 128
      %247 = vxpose.xlu0.b32.end [16/16] 0.0, 128
      %v248 = vpop.trf.xlu0
      %v249 = vpop.trf.xlu0
      %v250 = vpop.trf.xlu0
      %v251 = vpop.trf.xlu0
      %v252 = vpop.trf.xlu0
      %v253 = vpop.trf.xlu0
      %v254 = vpop.trf.xlu0
      %v255 = vpop.trf.xlu0
      %v256 = vpop.trf.xlu0
      %v257 = vpop.trf.xlu0
      %v258 = vpop.trf.xlu0
      %v259 = vpop.trf.xlu0
      %v260 = vpop.trf.xlu0
      %v261 = vpop.trf.xlu0
      %v262 = vpop.trf.xlu0
      %v263 = vpop.trf.xlu0
      %vm264 = vcmask 261120
      %v266 = vsel %vm264, %v248, 0
      %v269 = vsel %vm264, %v249, 0
      %271 = vmatpush.msra.mxu0 0.0
      %272 = vmatpush.msra.mxu0 0.0
      %273 = vmatpush.msra.mxu0 0.0
      %274 = vmatpush.msra.mxu0 0.0
      %275 = vmatpush.msra.mxu0 0.0
      %276 = vmatpush.msra.mxu0 0.0
      %277 = vmatpush.msra.mxu0 0.0
      %278 = vmatpush.msra.mxu0 0.0
      %279 = vmatpush.msra.mxu0 0.0
      %280 = vmatpush.msra.mxu0 0.0
      %281 = vmatpush.msra.mxu0 0.0
      %282 = vmatpush.msra.mxu0 0.0
      %283 = vmatpush.msra.mxu0 %v231
      %284 = vmatpush.msra.mxu0 %v230
      %285 = vmatpush.msra.mxu0 %v229
      %286 = vmatpush.msra.mxu0 %v228
      %287 = vmatmul.f32.gmra.mxu0 %v266
      %v288 = vpop.f32.mrf.mxu0
      %v289 = vadd.f32 0.0, %v288
      %290 = vmatmul.f32.gmra.mxu0 %v269
      %v291 = vpop.f32.mrf.mxu0
      %v292 = vadd.f32 0.0, %v291
      %293 = vdwg.mxu0
      %v294 = vmul.f32 %v228, %v228
      %v295 = vmul.f32 %v229, %v229
      %v296 = vmul.f32 %v230, %v230
      %v297 = vmul.f32 %v231, %v231
      %vm298 = vcmask 130048
      %v299 = vsel %vm298, %v294, 0.0
      %v300 = vsel %vm298, %v295, 0.0
      %v301 = vadd.f32 %v299, %v300
      %v302 = vsel %vm298, %v296, 0.0
      %v303 = vadd.f32 %v301, %v302
      %v304 = vsel %vm298, %v297, 0.0
      %v305 = vadd.f32 %v303, %v304
      %v306 = vrot.slane %v305, 4
      %v307 = vadd.f32 %v305, %v306
      %v308 = vrot.slane %v307, 2
      %v309 = vadd.f32 %v307, %v308
      %v310 = vrot.slane %v309, 1
      %v311 = vadd.f32 %v309, %v310
      %v312 = vmul.f32 %v289, 2.0
      %v313 = vmul.f32 %v292, 2.0
      %v314 = vsub.f32 %v312, %v311
      %v315 = vsub.f32 %v313, %v311
      %316 = vst.msk [vmem:[%s222] sm:$0xff] %vm298, %v314
      %317 = vst.msk [vmem:[%s222 + $0x8] sm:$0xff] %vm298, %v315
      %s318 = smul.u32 2, %s19
      %p319 = scmp.lt.s32.totalorder %s18, 1
      %s320 = scalar_select %p319, %s18, 1
      %p321 = scmp.lt.s32.totalorder %s318, 1
      %s322 = scalar_select %p321, %s318, 1
      %p323 = scmp.lt.s32.totalorder %s20, 0
      %s324 = scalar_select %p323, %s20, 0
      %s325 = sadd.s32 %s324, %s322
      %s326 = smul.addr %s320, 2
      %s327 = sadd.s32 %s325, %s326
      %s328 = smul.addr %s327, 8
      %s329 = scalar_lea.vmem %s2, %s328
      // Predicated region
      $region29: #{local_embedder_forward.6} parent=27 // pred_check
        %p330 = pneg %p110
      $region30: #{local_embedder_forward.6} parent=27 // pred_check_branch
        %332 = sbr.rel (%p330) target = $region32
      $region31: #{local_embedder_forward.6} parent=27 // pred_region
        %s333 = smul.u32 2, %s19
      $region32: #{local_embedder_forward.6} parent=27 // pred_fallthru
        _
    $region28: #{local_embedder_forward.6} parent=5 // pred_fallthru
      _
    %p334 = scmp.le.s32.totalorder 2, %s8
    // Predicated region
    $region33: #{local_embedder_forward.6} parent=5 // pred_check
      %p335 = pneg %p334
    $region34: #{local_embedder_forward.6} parent=5 // pred_check_branch
      %337 = sbr.rel (%p335) target = $region36
    $region35: #{local_embedder_forward.6} parent=5 // pred_region
      %s338 = ssub.s32 %s8, 2
      // Predicated region
      $region37: #{local_embedder_forward.6} parent=35 // pred_check
        %p339 = pneg %p116
      $region38: #{local_embedder_forward.6} parent=35 // pred_check_branch
        %341 = sbr.rel (%p339) target = $region40
      $region39: #{local_embedder_forward.6} parent=35 // pred_region
        %s342 = smul.u32 2, %s22
        %p343 = scmp.lt.s32.totalorder %s21, 1
        %s344 = scalar_select %p343, %s21, 1
        %p345 = scmp.lt.s32.totalorder %s342, 1
        %s346 = scalar_select %p345, %s342, 1
        %p347 = scmp.lt.s32.totalorder %s23, 0
        %s348 = scalar_select %p347, %s23, 0
        %s349 = sadd.s32 %s348, %s346
        %s350 = smul.addr %s344, 2
        %s351 = sadd.s32 %s349, %s350
        %s352 = smul.addr %s351, 8
        %s353 = scalar_lea.vmem %s2, %s352
      $region40: #{local_embedder_forward.6} parent=35 // pred_fallthru
        _
    $region36: #{local_embedder_forward.6} parent=5 // pred_fallthru
      _
  $region6: #{local_embedder_forward.6} parent=0 // loop_footer
    %s12 = sadd.s32 1, %s8
  $region7: #{local_embedder_forward.6} parent=0 // loop_footer_branch
    %7 = sbr.rel target = $region3
  $region8: #{local_embedder_forward.6} parent=0 // loop_exit
    _

// kernel: local_embedder_forward.4
$region0: #{local_embedder_forward.4}
  #allocation0 [shape = 'u32[]', space=smem, size = 0x4, offset = 0x4, fixed_abs, tag = 'smem constant byte address 0x4 - core index']
  #allocation1 [shape = 'u32[72,128]{1,0:T(1,128)}', space=vmem, size = 0x9000, scoped, tag = 'internal scratch']
  %s0 = inlined_call_operand.vmem [shape: f32[2,4,16], index: 0, kind: input, shape index: {}, may-alias: {0,1}]
  %s1 = inlined_call_operand.vmem [shape: f32[2,4,16], index: 1, kind: input, shape index: {}, may-alias: {0,1}]
  %s2 = inlined_call_operand.vmem [shape: f32[2,16,16], index: 2, kind: output, shape index: {}]
  %s3 = sld [smem:[#allocation0]]
  $region41: #{local_embedder_forward.4} parent=0
    _
  %s5 = ssub.s32 1, %s3
  %s6 = scalar_select 0, %s5, %s3
  loop: start=0, step=1, limit=4
  $region2: #{local_embedder_forward.4} parent=0 // loop_pre_header
    _
  $region3: #{local_embedder_forward.4} parent=0 // loop_header
    %s8 = sphi 0, %s12
    %p9 = scmp.ge.s32.totalorder %s8, 4
    %s15 = sphi 0, %s34
    %s16 = sphi 0, %s30
    %s17 = sphi 0, %s26
    %s18 = sphi 0, %s15
    %s19 = sphi 0, %s16
    %s20 = sphi 0, %s17
    %s21 = sphi 0, %s18
    %s22 = sphi 0, %s19
    %s23 = sphi 0, %s20
    %s39 = sphi 0, %s41
    %s42 = sphi 0, %s39
    %s43 = sphi 0, %s42
    %s59 = sphi 0, %s43
    %s67 = sphi 0, %s69
    %s70 = sphi 0, %s67
    %s71 = sphi 0, %s70
    %s87 = sphi 0, %s71
    %s97 = sphi 0, %s99
    %s100 = sphi 0, %s97
    %s101 = sphi 0, %s100
    %s117 = sphi 0, %s101
  $region4: #{local_embedder_forward.4} parent=0 // loop_header_branch
    %11 = sbr.rel (%p9) target = $region8
  $region5: #{local_embedder_forward.4} parent=0 // loop_body
    %s13 = ssub.s32 %s8, 1
    %s14 = ssub.s32 %s8, 2
    %s24 = sadd.s32 1, %s17
    %p25 = scmp.ge.s32.totalorder %s24, 1
    %s26 = scalar_select %p25, 0, %s24
    %s27 = sadd.s32 1, %s16
    %s28 = scalar_select %p25, %s27, %s16
    %p29 = scmp.ge.s32.totalorder %s28, 1
    %s30 = scalar_select %p29, 0, %s28
    %s31 = sadd.s32 1, %s15
    %s32 = scalar_select %p29, %s31, %s15
    %p33 = scmp.ge.s32.totalorder %s32, 2
    %s34 = scalar_select %p33, 0, %s32
    %s35 = ssub.s32 %s15, %s34
    %s36 = ssub.s32 %s16, %s30
    %s37 = sor.u32 %s35, %s36
    %p38 = scmp.eq.s32.totalorder %s37, 0
    %s40 = sadd.s32 %s39, 1
    %s41 = scalar_select %p38, %s39, %s40
    %p44 = pneg %p38
    %p45 = scmp.eq.s32.totalorder %s8, 1
    %p46 = por %p44, %p45
    %p47 = scmp.ne.s32.totalorder %s39, %s42
    %p48 = scmp.eq.s32.totalorder %s8, 0
    %p49 = por %p47, %p48
    %p50 = scmp.ne.s32.totalorder %s39, %s42
    %p51 = scmp.eq.s32.totalorder %s13, 1
    %p52 = por %p50, %p51
    %p53 = scmp.ne.s32.totalorder %s42, %s43
    %p54 = scmp.eq.s32.totalorder %s13, 0
    %p55 = por %p53, %p54
    %p56 = scmp.ne.s32.totalorder %s42, %s43
    %p57 = scmp.eq.s32.totalorder %s14, 1
    %p58 = por %p56, %p57
    %p60 = scmp.ne.s32.totalorder %s43, %s59
    %p61 = scmp.eq.s32.totalorder %s14, 0
    %p62 = por %p60, %p61
    %s63 = ssub.s32 %s15, %s34
    %s64 = ssub.s32 %s17, %s26
    %s65 = sor.u32 %s63, %s64
    %p66 = scmp.eq.s32.totalorder %s65, 0
    %s68 = sadd.s32 %s67, 1
    %s69 = scalar_select %p66, %s67, %s68
    %p72 = pneg %p66
    %p73 = scmp.eq.s32.totalorder %s8, 1
    %p74 = por %p72, %p73
    %p75 = scmp.ne.s32.totalorder %s67, %s70
    %p76 = scmp.eq.s32.totalorder %s8, 0
    %p77 = por %p75, %p76
    %p78 = scmp.ne.s32.totalorder %s67, %s70
    %p79 = scmp.eq.s32.totalorder %s13, 1
    %p80 = por %p78, %p79
    %p81 = scmp.ne.s32.totalorder %s70, %s71
    %p82 = scmp.eq.s32.totalorder %s13, 0
    %p83 = por %p81, %p82
    %p84 = scmp.ne.s32.totalorder %s70, %s71
    %p85 = scmp.eq.s32.totalorder %s14, 1
    %p86 = por %p84, %p85
    %p88 = scmp.ne.s32.totalorder %s71, %s87
    %p89 = scmp.eq.s32.totalorder %s14, 0
    %p90 = por %p88, %p89
    %s91 = ssub.s32 %s15, %s34
    %s92 = ssub.s32 %s16, %s30
    %s93 = sor.u32 %s91, %s92
    %s94 = ssub.s32 %s17, %s26
    %s95 = sor.u32 %s93, %s94
    %p96 = scmp.eq.s32.totalorder %s95, 0
    %s98 = sadd.s32 %s97, 1
    %s99 = scalar_select %p96, %s97, %s98
    %p102 = pneg %p96
    %p103 = scmp.eq.s32.totalorder %s8, 1
    %p104 = por %p102, %p103
    %p105 = scmp.ne.s32.totalorder %s97, %s100
    %p106 = scmp.eq.s32.totalorder %s8, 0
    %p107 = por %p105, %p106
    %p108 = scmp.ne.s32.totalorder %s97, %s100
    %p109 = scmp.eq.s32.totalorder %s13, 1
    %p110 = por %p108, %p109
    %p111 = scmp.ne.s32.totalorder %s100, %s101
    %p112 = scmp.eq.s32.totalorder %s13, 0
    %p113 = por %p111, %p112
    %p114 = scmp.ne.s32.totalorder %s100, %s101
    %p115 = scmp.eq.s32.totalorder %s14, 1
    %p116 = por %p114, %p115
    %p118 = scmp.ne.s32.totalorder %s101, %s117
    %p119 = scmp.eq.s32.totalorder %s14, 0
    %p120 = por %p118, %p119
    %p121 = scmp.le.s32.totalorder 1, %s8
    %p122 = scmp.lt.s32.totalorder %s8, 3
    %p123 = pnand %p121, %p122
    %p124 = pneg %p123
    // Predicated region
    $region9: #{local_embedder_forward.4} parent=5 // pred_check
      _
    $region10: #{local_embedder_forward.4} parent=5 // pred_check_branch
      %126 = sbr.rel (%p123) target = $region12
    $region11: #{local_embedder_forward.4} parent=5 // pred_region
      %s127 = ssub.s32 %s8, 1
    $region12: #{local_embedder_forward.4} parent=5 // pred_fallthru
      _
    %p128 = scmp.lt.s32.totalorder %s8, 2
    // Predicated region
    $region13: #{local_embedder_forward.4} parent=5 // pred_check
      %p129 = pneg %p128
    $region14: #{local_embedder_forward.4} parent=5 // pred_check_branch
      %131 = sbr.rel (%p129) target = $region16
    $region15: #{local_embedder_forward.4} parent=5 // pred_region
      // Predicated region
      $region17: #{local_embedder_forward.4} parent=15 // pred_check
        %p132 = pneg %p49
      $region18: #{local_embedder_forward.4} parent=15 // pred_check_branch
        %134 = sbr.rel (%p132) target = $region20
      $region19: #{local_embedder_forward.4} parent=15 // pred_region
        %p135 = scmp.lt.s32.totalorder %s15, 1
        %s136 = scalar_select %p135, %s15, 1
        %p137 = scmp.lt.s32.totalorder %s16, 0
        %s138 = scalar_select %p137, %s16, 0
        %s139 = sadd.s32 %s138, %s136
        %s140 = smul.addr %s139, 4
        %s141 = scalar_lea.vmem %s0, %s140
      $region20: #{local_embedder_forward.4} parent=15 // pred_fallthru
        _
      // Predicated region
      $region21: #{local_embedder_forward.4} parent=15 // pred_check
        %p142 = pneg %p77
      $region22: #{local_embedder_forward.4} parent=15 // pred_check_branch
        %144 = sbr.rel (%p142) target = $region24
      $region23: #{local_embedder_forward.4} parent=15 // pred_region
        %p145 = scmp.lt.s32.totalorder %s15, 1
        %s146 = scalar_select %p145, %s15, 1
        %p147 = scmp.lt.s32.totalorder %s17, 0
        %s148 = scalar_select %p147, %s17, 0
        %s149 = sadd.s32 %s148, %s146
        %s150 = smul.addr %s149, 4
        %s151 = scalar_lea.vmem %s1, %s150
      $region24: #{local_embedder_forward.4} parent=15 // pred_fallthru
        _
    $region16: #{local_embedder_forward.4} parent=5 // pred_fallthru
      _
    %p152 = scmp.le.s32.totalorder 1, %s8
    %p153 = scmp.lt.s32.totalorder %s8, 3
    %p154 = pnand %p152, %p153
    %p155 = pneg %p154
    // Predicated region
    $region25: #{local_embedder_forward.4} parent=5 // pred_check
      _
    $region26: #{local_embedder_forward.4} parent=5 // pred_check_branch
      %157 = sbr.rel (%p154) target = $region28
    $region27: #{local_embedder_forward.4} parent=5 // pred_region
      %s158 = ssub.s32 %s8, 1
      %p159 = scmp.lt.s32.totalorder %s18, 1
      %s160 = scalar_select %p159, %s18, 1
      %p161 = scmp.lt.s32.totalorder %s19, 0
      %s162 = scalar_select %p161, %s19, 0
      %s163 = sadd.s32 %s162, %s160
      %s164 = smul.addr %s163, 4
      %s165 = scalar_lea.vmem %s0, %s164
      %p166 = pneg %p55
      %p167 = pneg %p52
      %p168 = scmp.lt.s32.totalorder %s18, 1
      %s169 = scalar_select %p168, %s18, 1
      %p170 = scmp.lt.s32.totalorder %s20, 0
      %s171 = scalar_select %p170, %s20, 0
      %s172 = sadd.s32 %s171, %s169
      %s173 = smul.addr %s172, 4
      %s174 = scalar_lea.vmem %s1, %s173
      %p175 = pneg %p83
      %p176 = pneg %p80
      %p177 = pneg %p113
      %p178 = pneg %p110
      %s179 = smul.u32 2, %s19
      %p180 = scmp.lt.s32.totalorder %s18, 1
      %s181 = scalar_select %p180, %s18, 1
      %p182 = scmp.lt.s32.totalorder %s179, 1
      %s183 = scalar_select %p182, %s179, 1
      %p184 = scmp.lt.s32.totalorder %s20, 0
      %s185 = scalar_select %p184, %s20, 0
      %s186 = sadd.s32 %s185, %s183
      %s187 = smul.addr %s181, 2
      %s188 = sadd.s32 %s186, %s187
      %s189 = smul.addr %s188, 8
      %s190 = scalar_lea.vmem %s2, %s189
      %p191 = scmp.lt.s32.totalorder %s18, 1
      %s192 = scalar_select %p191, %s18, 1
      %p193 = scmp.lt.s32.totalorder %s19, 0
      %s194 = scalar_select %p193, %s19, 0
      %s195 = sadd.s32 %s194, %s192
      %s196 = smul.addr %s195, 4
      %s197 = scalar_lea.vmem %s0, %s196
      %p198 = scmp.lt.s32.totalorder %s18, 1
      %s199 = scalar_select %p198, %s18, 1
      %p200 = scmp.lt.s32.totalorder %s20, 0
      %s201 = scalar_select %p200, %s20, 0
      %s202 = sadd.s32 %s201, %s199
      %s203 = smul.addr %s202, 4
      %s204 = scalar_lea.vmem %s1, %s203
      %s205 = smul.u32 2, %s19
      %p206 = scmp.lt.s32.totalorder %s18, 1
      %s207 = scalar_select %p206, %s18, 1
      %p208 = scmp.lt.s32.totalorder %s205, 1
      %s209 = scalar_select %p208, %s205, 1
      %p210 = scmp.lt.s32.totalorder %s20, 0
      %s211 = scalar_select %p210, %s20, 0
      %s212 = sadd.s32 %s211, %s209
      %s213 = smul.addr %s207, 2
      %s214 = sadd.s32 %s212, %s213
      %s215 = smul.addr %s214, 8
      %s216 = scalar_lea.vmem %s2, %s215
      %s217 = smul.u32 2, %s19
      %v218 = vld [vmem:[%s197] sm:$0xf]
      %v219 = vld [vmem:[%s204] sm:$0xf]
      %220 = vxpose.xlu0.b32.start [1/16] %v218, 128
      %221 = vxpose.xlu0.b32.cont [2/16] 0.0, 128
      %222 = vxpose.xlu0.b32.cont [3/16] 0.0, 128
      %223 = vxpose.xlu0.b32.cont [4/16] 0.0, 128
      %224 = vxpose.xlu0.b32.cont [5/16] 0.0, 128
      %225 = vxpose.xlu0.b32.cont [6/16] 0.0, 128
      %226 = vxpose.xlu0.b32.cont [7/16] 0.0, 128
      %227 = vxpose.xlu0.b32.cont [8/16] 0.0, 128
      %228 = vxpose.xlu0.b32.cont [9/16] 0.0, 128
      %229 = vxpose.xlu0.b32.cont [10/16] 0.0, 128
      %230 = vxpose.xlu0.b32.cont [11/16] 0.0, 128
      %231 = vxpose.xlu0.b32.cont [12/16] 0.0, 128
      %232 = vxpose.xlu0.b32.cont [13/16] 0.0, 128
      %233 = vxpose.xlu0.b32.cont [14/16] 0.0, 128
      %234 = vxpose.xlu0.b32.cont [15/16] 0.0, 128
      %235 = vxpose.xlu0.b32.end [16/16] 0.0, 128
      %v236 = vpop.trf.xlu0
      %v237 = vpop.trf.xlu0
      %v238 = vpop.trf.xlu0
      %v239 = vpop.trf.xlu0
      %v240 = vpop.trf.xlu0
      %v241 = vpop.trf.xlu0
      %v242 = vpop.trf.xlu0
      %v243 = vpop.trf.xlu0
      %v244 = vpop.trf.xlu0
      %v245 = vpop.trf.xlu0
      %v246 = vpop.trf.xlu0
      %v247 = vpop.trf.xlu0
      %v248 = vpop.trf.xlu0
      %v249 = vpop.trf.xlu0
      %v250 = vpop.trf.xlu0
      %v251 = vpop.trf.xlu0
      %vm252 = vcmask 31744
      %v254 = vsel %vm252, %v236, 0
      %v257 = vsel %vm252, %v237, 0
      %vm259 = vcmask 1043456
      %v261 = vsel %vm259, %v219, 0
      %263 = vmatpush.msra.mxu0 0.0
      %264 = vmatpush.msra.mxu0 0.0
      %265 = vmatpush.msra.mxu0 0.0
      %266 = vmatpush.msra.mxu0 0.0
      %267 = vmatpush.msra.mxu0 0.0
      %268 = vmatpush.msra.mxu0 0.0
      %269 = vmatpush.msra.mxu0 0.0
      %270 = vmatpush.msra.mxu0 0.0
      %271 = vmatpush.msra.mxu0 0.0
      %272 = vmatpush.msra.mxu0 0.0
      %273 = vmatpush.msra.mxu0 0.0
      %274 = vmatpush.msra.mxu0 0.0
      %275 = vmatpush.msra.mxu0 0.0
      %276 = vmatpush.msra.mxu0 0.0
      %277 = vmatpush.msra.mxu0 0.0
      %278 = vmatpush.msra.mxu0 %v261
      %279 = vmatmul.f32.gmra.mxu0 %v254
      %v280 = vpop.f32.mrf.mxu0
      %v281 = vadd.f32 0.0, %v280
      %282 = vmatmul.f32.gmra.mxu0 %v257
      %v283 = vpop.f32.mrf.mxu0
      %v284 = vadd.f32 0.0, %v283
      %285 = vdwg.mxu0
      %v286 = vmul.f32 %v219, %v219
      %vm287 = vcmask 125952
      %v288 = vsel %vm287, %v286, 0.0
      %v289 = vrot.slane %v288, 4
      %v290 = vadd.f32 %v288, %v289
      %v291 = vrot.slane %v290, 2
      %v292 = vadd.f32 %v290, %v291
      %v293 = vrot.slane %v292, 1
      %v294 = vadd.f32 %v292, %v293
      %v295 = vmul.f32 %v281, 2.0
      %v296 = vmul.f32 %v284, 2.0
      %v297 = vsub.f32 %v295, %v294
      %v298 = vsub.f32 %v296, %v294
      %vm299 = vcmask 130048
      %300 = vst.msk [vmem:[%s216] sm:$0xff] %vm299, %v297
      %301 = vst.msk [vmem:[%s216 + $0x8] sm:$0xff] %vm299, %v298
      %s302 = smul.u32 2, %s19
      %p303 = scmp.lt.s32.totalorder %s18, 1
      %s304 = scalar_select %p303, %s18, 1
      %p305 = scmp.lt.s32.totalorder %s302, 1
      %s306 = scalar_select %p305, %s302, 1
      %p307 = scmp.lt.s32.totalorder %s20, 0
      %s308 = scalar_select %p307, %s20, 0
      %s309 = sadd.s32 %s308, %s306
      %s310 = smul.addr %s304, 2
      %s311 = sadd.s32 %s309, %s310
      %s312 = smul.addr %s311, 8
      %s313 = scalar_lea.vmem %s2, %s312
      // Predicated region
      $region29: #{local_embedder_forward.4} parent=27 // pred_check
        %p314 = pneg %p110
      $region30: #{local_embedder_forward.4} parent=27 // pred_check_branch
        %316 = sbr.rel (%p314) target = $region32
      $region31: #{local_embedder_forward.4} parent=27 // pred_region
        %s317 = smul.u32 2, %s19
      $region32: #{local_embedder_forward.4} parent=27 // pred_fallthru
        _
    $region28: #{local_embedder_forward.4} parent=5 // pred_fallthru
      _
    %p318 = scmp.le.s32.totalorder 2, %s8
    // Predicated region
    $region33: #{local_embedder_forward.4} parent=5 // pred_check
      %p319 = pneg %p318
    $region34: #{local_embedder_forward.4} parent=5 // pred_check_branch
      %321 = sbr.rel (%p319) target = $region36
    $region35: #{local_embedder_forward.4} parent=5 // pred_region
      %s322 = ssub.s32 %s8, 2
      // Predicated region
      $region37: #{local_embedder_forward.4} parent=35 // pred_check
        %p323 = pneg %p116
      $region38: #{local_embedder_forward.4} parent=35 // pred_check_branch
        %325 = sbr.rel (%p323) target = $region40
      $region39: #{local_embedder_forward.4} parent=35 // pred_region
        %s326 = smul.u32 2, %s22
        %p327 = scmp.lt.s32.totalorder %s21, 1
        %s328 = scalar_select %p327, %s21, 1
        %p329 = scmp.lt.s32.totalorder %s326, 1
        %s330 = scalar_select %p329, %s326, 1
        %p331 = scmp.lt.s32.totalorder %s23, 0
        %s332 = scalar_select %p331, %s23, 0
        %s333 = sadd.s32 %s332, %s330
        %s334 = smul.addr %s328, 2
        %s335 = sadd.s32 %s333, %s334
        %s336 = smul.addr %s335, 8
        %s337 = scalar_lea.vmem %s2, %s336
      $region40: #{local_embedder_forward.4} parent=35 // pred_fallthru
        _
    $region36: #{local_embedder_forward.4} parent=5 // pred_fallthru
      _
  $region6: #{local_embedder_forward.4} parent=0 // loop_footer
    %s12 = sadd.s32 1, %s8
  $region7: #{local_embedder_forward.4} parent=0 // loop_footer_branch
    %7 = sbr.rel target = $region3
  $region8: #{local_embedder_forward.4} parent=0 // loop_exit
    _

// kernel: local_embedder_forward.7
$region0: #{local_embedder_forward.7}
  #allocation0 [shape = 'u32[]', space=smem, size = 0x4, offset = 0x4, fixed_abs, tag = 'smem constant byte address 0x4 - core index']
  #allocation1 [shape = 'u32[72,128]{1,0:T(1,128)}', space=vmem, size = 0x9000, scoped, tag = 'internal scratch']
  #allocation2 [shape = 'f32[32,16]{1,0:T(8,128)}', space=vmem, size = 0x4000, scoped, tag = 'scratch operand']
  %s0 = inlined_call_operand.vmem [shape: s32[2,8,16], index: 0, kind: input, shape index: {}]
  %s1 = inlined_call_operand.vmem [shape: f32[2,32,16], index: 1, kind: input, shape index: {}, may-alias: {1,2}]
  %s2 = inlined_call_operand.vmem [shape: f32[2,32,16], index: 2, kind: input, shape index: {}, may-alias: {1,2}]
  %s3 = inlined_call_operand.vmem [shape: f32[32,32], index: 3, kind: input, shape index: {}]
  %s4 = inlined_call_operand.vmem [shape: f32[32,32], index: 4, kind: input, shape index: {}]
  %s5 = inlined_call_operand.vmem [shape: f32[32,1], index: 5, kind: input, shape index: {}]
  %s6 = inlined_call_operand.vmem [shape: f32[2,32,16], index: 6, kind: output, shape index: {}]
  %s7 = sld [smem:[#allocation0]]
  $region61: #{local_embedder_forward.7} parent=0
    _
  %s9 = ssub.s32 1, %s7
  %s10 = scalar_select 0, %s9, %s7
  loop: start=0, step=1, limit=4
  $region2: #{local_embedder_forward.7} parent=0 // loop_pre_header
    _
  $region3: #{local_embedder_forward.7} parent=0 // loop_header
    %s12 = sphi 0, %s16
    %p13 = scmp.ge.s32.totalorder %s12, 4
    %s19 = sphi 0, %s31
    %s20 = sphi 0, %s27
    %s21 = sphi 0, %s19
    %s22 = sphi 0, %s20
    %s23 = sphi 0, %s21
    %s24 = sphi 0, %s22
    %s36 = sphi 0, %s38
    %s39 = sphi 0, %s36
    %s40 = sphi 0, %s39
    %s56 = sphi 0, %s40
    %s62 = sphi 0, %s64
    %s65 = sphi 0, %s62
    %s66 = sphi 0, %s65
    %s82 = sphi 0, %s66
    %s90 = sphi 0, %s92
    %s93 = sphi 0, %s90
    %s94 = sphi 0, %s93
    %s110 = sphi 0, %s94
    %s114 = sphi 0, %s114
    %s116 = sphi 0, %s114
    %s117 = sphi 0, %s116
    %s131 = sphi 0, %s117
    %s135 = sphi 0, %s135
    %s137 = sphi 0, %s135
    %s138 = sphi 0, %s137
    %s152 = sphi 0, %s138
    %s156 = sphi 0, %s156
    %s158 = sphi 0, %s156
    %s159 = sphi 0, %s158
    %s173 = sphi 0, %s159
    %s181 = sphi 0, %s183
    %s184 = sphi 0, %s181
    %s185 = sphi 0, %s184
    %s201 = sphi 0, %s185
  $region4: #{local_embedder_forward.7} parent=0 // loop_header_branch
    %15 = sbr.rel (%p13) target = $region8
  $region5: #{local_embedder_forward.7} parent=0 // loop_body
    %s17 = ssub.s32 %s12, 1
    %s18 = ssub.s32 %s12, 2
    %s25 = sadd.s32 1, %s20
    %p26 = scmp.ge.s32.totalorder %s25, 1
    %s27 = scalar_select %p26, 0, %s25
    %s28 = sadd.s32 1, %s19
    %s29 = scalar_select %p26, %s28, %s19
    %p30 = scmp.ge.s32.totalorder %s29, 2
    %s31 = scalar_select %p30, 0, %s29
    %s32 = ssub.s32 %s19, %s31
    %s33 = ssub.s32 %s20, %s27
    %s34 = sor.u32 %s32, %s33
    %p35 = scmp.eq.s32.totalorder %s34, 0
    %s37 = sadd.s32 %s36, 1
    %s38 = scalar_select %p35, %s36, %s37
    %p41 = pneg %p35
    %p42 = scmp.eq.s32.totalorder %s12, 1
    %p43 = por %p41, %p42
    %p44 = scmp.ne.s32.totalorder %s36, %s39
    %p45 = scmp.eq.s32.totalorder %s12, 0
    %p46 = por %p44, %p45
    %p47 = scmp.ne.s32.totalorder %s36, %s39
    %p48 = scmp.eq.s32.totalorder %s17, 1
    %p49 = por %p47, %p48
    %p50 = scmp.ne.s32.totalorder %s39, %s40
    %p51 = scmp.eq.s32.totalorder %s17, 0
    %p52 = por %p50, %p51
    %p53 = scmp.ne.s32.totalorder %s39, %s40
    %p54 = scmp.eq.s32.totalorder %s18, 1
    %p55 = por %p53, %p54
    %p57 = scmp.ne.s32.totalorder %s40, %s56
    %p58 = scmp.eq.s32.totalorder %s18, 0
    %p59 = por %p57, %p58
    %s60 = ssub.s32 %s19, %s31
    %p61 = scmp.eq.s32.totalorder %s60, 0
    %s63 = sadd.s32 %s62, 1
    %s64 = scalar_select %p61, %s62, %s63
    %p67 = pneg %p61
    %p68 = scmp.eq.s32.totalorder %s12, 1
    %p69 = por %p67, %p68
    %p70 = scmp.ne.s32.totalorder %s62, %s65
    %p71 = scmp.eq.s32.totalorder %s12, 0
    %p72 = por %p70, %p71
    %p73 = scmp.ne.s32.totalorder %s62, %s65
    %p74 = scmp.eq.s32.totalorder %s17, 1
    %p75 = por %p73, %p74
    %p76 = scmp.ne.s32.totalorder %s65, %s66
    %p77 = scmp.eq.s32.totalorder %s17, 0
    %p78 = por %p76, %p77
    %p79 = scmp.ne.s32.totalorder %s65, %s66
    %p80 = scmp.eq.s32.totalorder %s18, 1
    %p81 = por %p79, %p80
    %p83 = scmp.ne.s32.totalorder %s66, %s82
    %p84 = scmp.eq.s32.totalorder %s18, 0
    %p85 = por %p83, %p84
    %s86 = ssub.s32 %s19, %s31
    %s87 = ssub.s32 %s20, %s27
    %s88 = sor.u32 %s86, %s87
    %p89 = scmp.eq.s32.totalorder %s88, 0
    %s91 = sadd.s32 %s90, 1
    %s92 = scalar_select %p89, %s90, %s91
    %p95 = pneg %p89
    %p96 = scmp.eq.s32.totalorder %s12, 1
    %p97 = por %p95, %p96
    %p98 = scmp.ne.s32.totalorder %s90, %s93
    %p99 = scmp.eq.s32.totalorder %s12, 0
    %p100 = por %p98, %p99
    %p101 = scmp.ne.s32.totalorder %s90, %s93
    %p102 = scmp.eq.s32.totalorder %s17, 1
    %p103 = por %p101, %p102
    %p104 = scmp.ne.s32.totalorder %s93, %s94
    %p105 = scmp.eq.s32.totalorder %s17, 0
    %p106 = por %p104, %p105
    %p107 = scmp.ne.s32.totalorder %s93, %s94
    %p108 = scmp.eq.s32.totalorder %s18, 1
    %p109 = por %p107, %p108
    %p111 = scmp.ne.s32.totalorder %s94, %s110
    %p112 = scmp.eq.s32.totalorder %s18, 0
    %p113 = por %p111, %p112
    %s115 = sadd.s32 %s114, 1
    %p118 = scmp.eq.s32.totalorder %s12, 1
    %p119 = scmp.ne.s32.totalorder %s114, %s116
    %p120 = scmp.eq.s32.totalorder %s12, 0
    %p121 = por %p119, %p120
    %p122 = scmp.ne.s32.totalorder %s114, %s116
    %p123 = scmp.eq.s32.totalorder %s17, 1
    %p124 = por %p122, %p123
    %p125 = scmp.ne.s32.totalorder %s116, %s117
    %p126 = scmp.eq.s32.totalorder %s17, 0
    %p127 = por %p125, %p126
    %p128 = scmp.ne.s32.totalorder %s116, %s117
    %p129 = scmp.eq.s32.totalorder %s18, 1
    %p130 = por %p128, %p129
    %p132 = scmp.ne.s32.totalorder %s117, %s131
    %p133 = scmp.eq.s32.totalorder %s18, 0
    %p134 = por %p132, %p133
    %s136 = sadd.s32 %s135, 1
    %p139 = scmp.eq.s32.totalorder %s12, 1
    %p140 = scmp.ne.s32.totalorder %s135, %s137
    %p141 = scmp.eq.s32.totalorder %s12, 0
    %p142 = por %p140, %p141
    %p143 = scmp.ne.s32.totalorder %s135, %s137
    %p144 = scmp.eq.s32.totalorder %s17, 1
    %p145 = por %p143, %p144
    %p146 = scmp.ne.s32.totalorder %s137, %s138
    %p147 = scmp.eq.s32.totalorder %s17, 0
    %p148 = por %p146, %p147
    %p149 = scmp.ne.s32.totalorder %s137, %s138
    %p150 = scmp.eq.s32.totalorder %s18, 1
    %p151 = por %p149, %p150
    %p153 = scmp.ne.s32.totalorder %s138, %s152
    %p154 = scmp.eq.s32.totalorder %s18, 0
    %p155 = por %p153, %p154
    %s157 = sadd.s32 %s156, 1
    %p160 = scmp.eq.s32.totalorder %s12, 1
    %p161 = scmp.ne.s32.totalorder %s156, %s158
    %p162 = scmp.eq.s32.totalorder %s12, 0
    %p163 = por %p161, %p162
    %p164 = scmp.ne.s32.totalorder %s156, %s158
    %p165 = scmp.eq.s32.totalorder %s17, 1
    %p166 = por %p164, %p165
    %p167 = scmp.ne.s32.totalorder %s158, %s159
    %p168 = scmp.eq.s32.totalorder %s17, 0
    %p169 = por %p167, %p168
    %p170 = scmp.ne.s32.totalorder %s158, %s159
    %p171 = scmp.eq.s32.totalorder %s18, 1
    %p172 = por %p170, %p171
    %p174 = scmp.ne.s32.totalorder %s159, %s173
    %p175 = scmp.eq.s32.totalorder %s18, 0
    %p176 = por %p174, %p175
    %s177 = ssub.s32 %s19, %s31
    %s178 = ssub.s32 %s20, %s27
    %s179 = sor.u32 %s177, %s178
    %p180 = scmp.eq.s32.totalorder %s179, 0
    %s182 = sadd.s32 %s181, 1
    %s183 = scalar_select %p180, %s181, %s182
    %p186 = pneg %p180
    %p187 = scmp.eq.s32.totalorder %s12, 1
    %p188 = por %p186, %p187
    %p189 = scmp.ne.s32.totalorder %s181, %s184
    %p190 = scmp.eq.s32.totalorder %s12, 0
    %p191 = por %p189, %p190
    %p192 = scmp.ne.s32.totalorder %s181, %s184
    %p193 = scmp.eq.s32.totalorder %s17, 1
    %p194 = por %p192, %p193
    %p195 = scmp.ne.s32.totalorder %s184, %s185
    %p196 = scmp.eq.s32.totalorder %s17, 0
    %p197 = por %p195, %p196
    %p198 = scmp.ne.s32.totalorder %s184, %s185
    %p199 = scmp.eq.s32.totalorder %s18, 1
    %p200 = por %p198, %p199
    %p202 = scmp.ne.s32.totalorder %s185, %s201
    %p203 = scmp.eq.s32.totalorder %s18, 0
    %p204 = por %p202, %p203
    %p205 = scmp.le.s32.totalorder 1, %s12
    %p206 = scmp.lt.s32.totalorder %s12, 3
    %p207 = pnand %p205, %p206
    %p208 = pneg %p207
    // Predicated region
    $region9: #{local_embedder_forward.7} parent=5 // pred_check
      _
    $region10: #{local_embedder_forward.7} parent=5 // pred_check_branch
      %210 = sbr.rel (%p207) target = $region12
    $region11: #{local_embedder_forward.7} parent=5 // pred_region
      %s211 = ssub.s32 %s12, 1
      // Predicated region
      $region13: #{local_embedder_forward.7} parent=11 // pred_check
        %p212 = pneg %p127
      $region14: #{local_embedder_forward.7} parent=11 // pred_check_branch
        %214 = sbr.rel (%p212) target = $region16
      $region15: #{local_embedder_forward.7} parent=11 // pred_region
        _
      $region16: #{local_embedder_forward.7} parent=11 // pred_fallthru
        _
      // Predicated region
      $region17: #{local_embedder_forward.7} parent=11 // pred_check
        %p215 = pneg %p148
      $region18: #{local_embedder_forward.7} parent=11 // pred_check_branch
        %217 = sbr.rel (%p215) target = $region20
      $region19: #{local_embedder_forward.7} parent=11 // pred_region
        _
      $region20: #{local_embedder_forward.7} parent=11 // pred_fallthru
        _
      // Predicated region
      $region21: #{local_embedder_forward.7} parent=11 // pred_check
        %p218 = pneg %p169
      $region22: #{local_embedder_forward.7} parent=11 // pred_check_branch
        %220 = sbr.rel (%p218) target = $region24
      $region23: #{local_embedder_forward.7} parent=11 // pred_region
        _
      $region24: #{local_embedder_forward.7} parent=11 // pred_fallthru
        _
    $region12: #{local_embedder_forward.7} parent=5 // pred_fallthru
      _
    %p221 = scmp.lt.s32.totalorder %s12, 2
    // Predicated region
    $region25: #{local_embedder_forward.7} parent=5 // pred_check
      %p222 = pneg %p221
    $region26: #{local_embedder_forward.7} parent=5 // pred_check_branch
      %224 = sbr.rel (%p222) target = $region28
    $region27: #{local_embedder_forward.7} parent=5 // pred_region
      // Predicated region
      $region29: #{local_embedder_forward.7} parent=27 // pred_check
        %p225 = pneg %p46
      $region30: #{local_embedder_forward.7} parent=27 // pred_check_branch
        %227 = sbr.rel (%p225) target = $region32
      $region31: #{local_embedder_forward.7} parent=27 // pred_region
        %p228 = scmp.lt.s32.totalorder %s19, 1
        %s229 = scalar_select %p228, %s19, 1
        %p230 = scmp.lt.s32.totalorder %s20, 0
        %s231 = scalar_select %p230, %s20, 0
        %s232 = sadd.s32 %s231, %s229
        %s233 = smul.addr %s232, 8
        %s234 = scalar_lea.vmem %s0, %s233
      $region32: #{local_embedder_forward.7} parent=27 // pred_fallthru
        _
      // Predicated region
      $region33: #{local_embedder_forward.7} parent=27 // pred_check
        %p235 = pneg %p72
      $region34: #{local_embedder_forward.7} parent=27 // pred_check_branch
        %237 = sbr.rel (%p235) target = $region36
      $region35: #{local_embedder_forward.7} parent=27 // pred_region
        %p238 = scmp.lt.s32.totalorder %s19, 1
        %s239 = scalar_select %p238, %s19, 1
        %s240 = smul.addr %s239, 4
        %s241 = smul.addr %s240, 8
        %s242 = scalar_lea.vmem %s1, %s241
      $region36: #{local_embedder_forward.7} parent=27 // pred_fallthru
        _
      // Predicated region
      $region37: #{local_embedder_forward.7} parent=27 // pred_check
        %p243 = pneg %p100
      $region38: #{local_embedder_forward.7} parent=27 // pred_check_branch
        %245 = sbr.rel (%p243) target = $region40
      $region39: #{local_embedder_forward.7} parent=27 // pred_region
        %p246 = scmp.lt.s32.totalorder %s19, 1
        %s247 = scalar_select %p246, %s19, 1
        %p248 = scmp.lt.s32.totalorder %s20, 0
        %s249 = scalar_select %p248, %s20, 0
        %s250 = smul.addr %s247, 4
        %s251 = sadd.s32 %s249, %s250
        %s252 = smul.addr %s251, 8
        %s253 = scalar_lea.vmem %s2, %s252
      $region40: #{local_embedder_forward.7} parent=27 // pred_fallthru
        _
    $region28: #{local_embedder_forward.7} parent=5 // pred_fallthru
      _
    %p254 = scmp.le.s32.totalorder 1, %s12
    %p255 = scmp.lt.s32.totalorder %s12, 3
    %p256 = pnand %p254, %p255
    %p257 = pneg %p256
    // Predicated region
    $region41: #{local_embedder_forward.7} parent=5 // pred_check
      _
    $region42: #{local_embedder_forward.7} parent=5 // pred_check_branch
      %259 = sbr.rel (%p256) target = $region44
    $region43: #{local_embedder_forward.7} parent=5 // pred_region
      %s260 = ssub.s32 %s12, 1
      %p261 = scmp.lt.s32.totalorder %s21, 1
      %s262 = scalar_select %p261, %s21, 1
      %p263 = scmp.lt.s32.totalorder %s22, 0
      %s264 = scalar_select %p263, %s22, 0
      %s265 = sadd.s32 %s264, %s262
      %s266 = smul.addr %s265, 8
      %s267 = scalar_lea.vmem %s0, %s266
      %p268 = pneg %p52
      %p269 = pneg %p49
      %p270 = scmp.lt.s32.totalorder %s21, 1
      %s271 = scalar_select %p270, %s21, 1
      %s272 = smul.addr %s271, 4
      %s273 = smul.addr %s272, 8
      %s274 = scalar_lea.vmem %s1, %s273
      %p275 = pneg %p78
      %p276 = pneg %p75
      %p277 = scmp.lt.s32.totalorder %s21, 1
      %s278 = scalar_select %p277, %s21, 1
      %p279 = scmp.lt.s32.totalorder %s22, 0
      %s280 = scalar_select %p279, %s22, 0
      %s281 = smul.addr %s278, 4
      %s282 = sadd.s32 %s280, %s281
      %s283 = smul.addr %s282, 8
      %s284 = scalar_lea.vmem %s2, %s283
      %p285 = pneg %p106
      %p286 = pneg %p103
      %p287 = pneg %p127
      %p288 = pneg %p124
      %p289 = pneg %p148
      %p290 = pneg %p145
      %p291 = pneg %p169
      %p292 = pneg %p166
      %p293 = pneg %p197
      %p294 = pneg %p194
      %p295 = scmp.lt.s32.totalorder %s21, 1
      %s296 = scalar_select %p295, %s21, 1
      %p297 = scmp.lt.s32.totalorder %s22, 0
      %s298 = scalar_select %p297, %s22, 0
      %s299 = smul.addr %s296, 4
      %s300 = sadd.s32 %s298, %s299
      %s301 = smul.addr %s300, 8
      %s302 = scalar_lea.vmem %s6, %s301
      %p303 = scmp.lt.s32.totalorder %s21, 1
      %s304 = scalar_select %p303, %s21, 1
      %p305 = scmp.lt.s32.totalorder %s22, 0
      %s306 = scalar_select %p305, %s22, 0
      %s307 = sadd.s32 %s306, %s304
      %s308 = smul.addr %s307, 8
      %s309 = scalar_lea.vmem %s0, %s308
      %p310 = scmp.lt.s32.totalorder %s21, 1
      %s311 = scalar_select %p310, %s21, 1
      %s312 = smul.addr %s311, 4
      %s313 = smul.addr %s312, 8
      %s314 = scalar_lea.vmem %s1, %s313
      %p315 = scmp.lt.s32.totalorder %s21, 1
      %s316 = scalar_select %p315, %s21, 1
      %p317 = scmp.lt.s32.totalorder %s22, 0
      %s318 = scalar_select %p317, %s22, 0
      %s319 = smul.addr %s316, 4
      %s320 = sadd.s32 %s318, %s319
      %s321 = smul.addr %s320, 8
      %s322 = scalar_lea.vmem %s2, %s321
      %p323 = scmp.lt.s32.totalorder %s21, 1
      %s324 = scalar_select %p323, %s21, 1
      %p325 = scmp.lt.s32.totalorder %s22, 0
      %s326 = scalar_select %p325, %s22, 0
      %s327 = smul.addr %s324, 4
      %s328 = sadd.s32 %s326, %s327
      %s329 = smul.addr %s328, 8
      %s330 = scalar_lea.vmem %s6, %s329
      %p331 = scmp.eq.s32.totalorder %s22, 0
      // Predicated region
      $region45: #{local_embedder_forward.7} parent=43 // pred_check
        %p332 = pneg %p331
      $region46: #{local_embedder_forward.7} parent=43 // pred_check_branch
        %334 = sbr.rel (%p332) target = $region48
      $region47: #{local_embedder_forward.7} parent=43 // pred_region
        %v335 = vld [vmem:[%s3] sm:$0xff]
        %v336 = vld [vmem:[%s3 + $0x8] sm:$0xff]
        %v337 = vld [vmem:[%s3 + $0x10] sm:$0xff]
        %v338 = vld [vmem:[%s3 + $0x18] sm:$0xff]
        %v339 = vld [vmem:[%s314] sm:$0xff]
        %v340 = vld [vmem:[%s314 + $0x8] sm:$0xff]
        %v341 = vld [vmem:[%s314 + $0x10] sm:$0xff]
        %v342 = vld [vmem:[%s314 + $0x18] sm:$0xff]
        %vm343 = vcmask 261120
        %v345 = vsel %vm343, %v335, 0
        %v348 = vsel %vm343, %v336, 0
        %v351 = vsel %vm343, %v337, 0
        %v354 = vsel %vm343, %v338, 0
        %356 = vmatpush.msra.mxu0 0.0
        %357 = vmatpush.msra.mxu0 0.0
        %358 = vmatpush.msra.mxu0 0.0
        %359 = vmatpush.msra.mxu0 0.0
        %360 = vmatpush.msra.mxu0 0.0
        %361 = vmatpush.msra.mxu0 0.0
        %362 = vmatpush.msra.mxu0 0.0
        %363 = vmatpush.msra.mxu0 0.0
        %364 = vmatpush.msra.mxu0 0.0
        %365 = vmatpush.msra.mxu0 0.0
        %366 = vmatpush.msra.mxu0 0.0
        %367 = vmatpush.msra.mxu0 0.0
        %368 = vmatpush.msra.mxu0 %v342
        %369 = vmatpush.msra.mxu0 %v341
        %370 = vmatpush.msra.mxu0 %v340
        %371 = vmatpush.msra.mxu0 %v339
        %372 = vmatmul.f32.gmra.mxu0 %v345
        %v373 = vpop.f32.mrf.mxu0
        %v374 = vadd.f32 0.0, %v373
        %375 = vmatmul.f32.gmra.mxu0 %v348
        %v376 = vpop.f32.mrf.mxu0
        %v377 = vadd.f32 0.0, %v376
        %378 = vmatmul.f32.gmra.mxu0 %v351
        %v379 = vpop.f32.mrf.mxu0
        %v380 = vadd.f32 0.0, %v379
        %381 = vmatmul.f32.gmra.mxu0 %v354
        %v382 = vpop.f32.mrf.mxu0
        %v383 = vadd.f32 0.0, %v382
        %384 = vdwg.mxu0
        %vm385 = vcmask 130048
        %386 = vst.msk [vmem:[#allocation2] sm:$0xff] %vm385, %v374
        %387 = vst.msk [vmem:[#allocation2 + $0x8] sm:$0xff] %vm385, %v377
        %388 = vst.msk [vmem:[#allocation2 + $0x10] sm:$0xff] %vm385, %v380
        %389 = vst.msk [vmem:[#allocation2 + $0x18] sm:$0xff] %vm385, %v383
      $region48: #{local_embedder_forward.7} parent=43 // pred_fallthru
        _
      %v390 = vld [vmem:[%s309] sm:$0xff]
      %v391 = vld [vmem:[%s4] sm:$0xff]
      %v392 = vld [vmem:[%s4 + $0x8] sm:$0xff]
      %v393 = vld [vmem:[%s4 + $0x10] sm:$0xff]
      %v394 = vld [vmem:[%s4 + $0x18] sm:$0xff]
      %v395 = vld [vmem:[%s322] sm:$0xff]
      %v396 = vld [vmem:[%s322 + $0x8] sm:$0xff]
      %v397 = vld [vmem:[%s322 + $0x10] sm:$0xff]
      %v398 = vld [vmem:[%s322 + $0x18] sm:$0xff]
      %v399 = vld [vmem:[%s5] sm:$0xff]
      %v400 = vld [vmem:[%s5 + $0x8] sm:$0xff]
      %v401 = vld [vmem:[%s5 + $0x10] sm:$0xff]
      %v402 = vld [vmem:[%s5 + $0x18] sm:$0xff]
      %404 = vset.pattern.permute.xlu0 0
      %405 = vperm.xlu0 %404, %v399
      %v406 = vpop.permute.xlu0 %405
      %409 = vset.pattern.permute.xlu0 0
      %410 = vperm.xlu0 %409, %v400
      %v411 = vpop.permute.xlu0 %410
      %414 = vset.pattern.permute.xlu0 0
      %415 = vperm.xlu0 %414, %v401
      %v416 = vpop.permute.xlu0 %415
      %419 = vset.pattern.permute.xlu0 0
      %420 = vperm.xlu0 %419, %v402
      %v421 = vpop.permute.xlu0 %420
      %vm423 = vcmask 261120
      %v425 = vsel %vm423, %v391, 0
      %v428 = vsel %vm423, %v392, 0
      %v431 = vsel %vm423, %v393, 0
      %v434 = vsel %vm423, %v394, 0
      %436 = vmatpush.msra.mxu0 0.0
      %437 = vmatpush.msra.mxu0 0.0
      %438 = vmatpush.msra.mxu0 0.0
      %439 = vmatpush.msra.mxu0 0.0
      %440 = vmatpush.msra.mxu0 0.0
      %441 = vmatpush.msra.mxu0 0.0
      %442 = vmatpush.msra.mxu0 0.0
      %443 = vmatpush.msra.mxu0 0.0
      %444 = vmatpush.msra.mxu0 0.0
      %445 = vmatpush.msra.mxu0 0.0
      %446 = vmatpush.msra.mxu0 0.0
      %447 = vmatpush.msra.mxu0 0.0
      %448 = vmatpush.msra.mxu0 %v398
      %449 = vmatpush.msra.mxu0 %v397
      %450 = vmatpush.msra.mxu0 %v396
      %451 = vmatpush.msra.mxu0 %v395
      %452 = vmatmul.f32.gmra.mxu0 %v425
      %v453 = vpop.f32.mrf.mxu0
      %v454 = vadd.f32 %v406, %v453
      %455 = vmatmul.f32.gmra.mxu0 %v428
      %v456 = vpop.f32.mrf.mxu0
      %v457 = vadd.f32 %v411, %v456
      %458 = vmatmul.f32.gmra.mxu0 %v431
      %v459 = vpop.f32.mrf.mxu0
      %v460 = vadd.f32 %v416, %v459
      %461 = vmatmul.f32.gmra.mxu0 %v434
      %v462 = vpop.f32.mrf.mxu0
      %v463 = vadd.f32 %v421, %v462
      %464 = vdwg.mxu0
      %v465 = vld [vmem:[#allocation2] sm:$0xff]
      %v466 = vld [vmem:[#allocation2 + $0x8] sm:$0xff]
      %v467 = vld [vmem:[#allocation2 + $0x10] sm:$0xff]
      %v468 = vld [vmem:[#allocation2 + $0x18] sm:$0xff]
      %v469 = vlaneseq
      %v470 = vshrl.u32 %v469, 7
      %v471 = vadd.s32 %v470, 8
      %v472 = vperm.slane %v390, 0
      %vm473 = vcmp.eq.s32.totalorder %v472, %v470
      %vm474 = vcmp.eq.s32.totalorder %v472, %v471
      %v475 = vsel %vm473, 1, 0
      %v476 = vsel %vm474, 1, 0
      %v477 = vcvt.s32.f32 %v475
      %v478 = vcvt.s32.f32 %v476
      %vm479 = vcmask 130048
      %v481 = vsel %vm479, %v465, 0
      %v484 = vsel %vm479, %v466, 0
      %v487 = vsel %vm479, %v467, 0
      %v490 = vsel %vm479, %v468, 0
      %492 = vmatpush.msra.mxu0 0.0
      %493 = vmatpush.msra.mxu0 0.0
      %494 = vmatpush.msra.mxu0 0.0
      %495 = vmatpush.msra.mxu0 0.0
      %496 = vmatpush.msra.mxu0 0.0
      %497 = vmatpush.msra.mxu0 0.0
      %498 = vmatpush.msra.mxu0 0.0
      %499 = vmatpush.msra.mxu0 0.0
      %500 = vmatpush.msra.mxu0 0.0
      %501 = vmatpush.msra.mxu0 0.0
      %502 = vmatpush.msra.mxu0 0.0
      %503 = vmatpush.msra.mxu0 0.0
      %504 = vmatpush.msra.mxu0 0.0
      %505 = vmatpush.msra.mxu0 0.0
      %506 = vmatpush.msra.mxu0 %v478
      %507 = vmatpush.msra.mxu0 %v477
      %508 = vmatmul.f32.gmra.mxu0 %v481
      %v509 = vpop.f32.mrf.mxu0
      %v510 = vadd.f32 0.0, %v509
      %511 = vmatmul.f32.gmra.mxu0 %v484
      %v512 = vpop.f32.mrf.mxu0
      %v513 = vadd.f32 0.0, %v512
      %514 = vmatmul.f32.gmra.mxu0 %v487
      %v515 = vpop.f32.mrf.mxu0
      %v516 = vadd.f32 0.0, %v515
      %517 = vmatmul.f32.gmra.mxu0 %v490
      %v518 = vpop.f32.mrf.mxu0
      %v519 = vadd.f32 0.0, %v518
      %520 = vdwg.mxu0
      %v521 = vperm.slane %v390, 1
      %vm522 = vcmp.eq.s32.totalorder %v521, %v470
      %vm523 = vcmp.eq.s32.totalorder %v521, %v471
      %v524 = vsel %vm522, 1, 0
      %v525 = vsel %vm523, 1, 0
      %v526 = vcvt.s32.f32 %v524
      %v527 = vcvt.s32.f32 %v525
      %528 = vmatpush.msra.mxu0 0.0
      %529 = vmatpush.msra.mxu0 0.0
      %530 = vmatpush.msra.mxu0 0.0
      %531 = vmatpush.msra.mxu0 0.0
      %532 = vmatpush.msra.mxu0 0.0
      %533 = vmatpush.msra.mxu0 0.0
      %534 = vmatpush.msra.mxu0 0.0
      %535 = vmatpush.msra.mxu0 0.0
      %536 = vmatpush.msra.mxu0 0.0
      %537 = vmatpush.msra.mxu0 0.0
      %538 = vmatpush.msra.mxu0 0.0
      %539 = vmatpush.msra.mxu0 0.0
      %540 = vmatpush.msra.mxu0 0.0
      %541 = vmatpush.msra.mxu0 0.0
      %542 = vmatpush.msra.mxu0 %v527
      %543 = vmatpush.msra.mxu0 %v526
      %544 = vmatmul.f32.gmra.mxu0 %v481
      %v545 = vpop.f32.mrf.mxu0
      %v546 = vadd.f32 0.0, %v545
      %547 = vmatmul.f32.gmra.mxu0 %v484
      %v548 = vpop.f32.mrf.mxu0
      %v549 = vadd.f32 0.0, %v548
      %550 = vmatmul.f32.gmra.mxu0 %v487
      %v551 = vpop.f32.mrf.mxu0
      %v552 = vadd.f32 0.0, %v551
      %553 = vmatmul.f32.gmra.mxu0 %v490
      %v554 = vpop.f32.mrf.mxu0
      %v555 = vadd.f32 0.0, %v554
      %556 = vdwg.mxu0
      %v557 = vmax.f32 %v510, %v546
      %v558 = vmax.f32 %v513, %v549
      %v559 = vmax.f32 %v516, %v552
      %v560 = vmax.f32 %v519, %v555
      %v561 = vperm.slane %v390, 2
      %vm562 = vcmp.eq.s32.totalorder %v561, %v470
      %vm563 = vcmp.eq.s32.totalorder %v561, %v471
      %v564 = vsel %vm562, 1, 0
      %v565 = vsel %vm563, 1, 0
      %v566 = vcvt.s32.f32 %v564
      %v567 = vcvt.s32.f32 %v565
      %568 = vmatpush.msra.mxu0 0.0
      %569 = vmatpush.msra.mxu0 0.0
      %570 = vmatpush.msra.mxu0 0.0
      %571 = vmatpush.msra.mxu0 0.0
      %572 = vmatpush.msra.mxu0 0.0
      %573 = vmatpush.msra.mxu0 0.0
      %574 = vmatpush.msra.mxu0 0.0
      %575 = vmatpush.msra.mxu0 0.0
      %576 = vmatpush.msra.mxu0 0.0
      %577 = vmatpush.msra.mxu0 0.0
      %578 = vmatpush.msra.mxu0 0.0
      %579 = vmatpush.msra.mxu0 0.0
      %580 = vmatpush.msra.mxu0 0.0
      %581 = vmatpush.msra.mxu0 0.0
      %582 = vmatpush.msra.mxu0 %v567
      %583 = vmatpush.msra.mxu0 %v566
      %584 = vmatmul.f32.gmra.mxu0 %v481
      %v585 = vpop.f32.mrf.mxu0
      %v586 = vadd.f32 0.0, %v585
      %587 = vmatmul.f32.gmra.mxu0 %v484
      %v588 = vpop.f32.mrf.mxu0
      %v589 = vadd.f32 0.0, %v588
      %590 = vmatmul.f32.gmra.mxu0 %v487
      %v591 = vpop.f32.mrf.mxu0
      %v592 = vadd.f32 0.0, %v591
      %593 = vmatmul.f32.gmra.mxu0 %v490
      %v594 = vpop.f32.mrf.mxu0
      %v595 = vadd.f32 0.0, %v594
      %596 = vdwg.mxu0
      %v597 = vmax.f32 %v557, %v586
      %v598 = vmax.f32 %v558, %v589
      %v599 = vmax.f32 %v559, %v592
      %v600 = vmax.f32 %v560, %v595
      %v601 = vperm.slane %v390, 3
      %vm602 = vcmp.eq.s32.totalorder %v601, %v470
      %vm603 = vcmp.eq.s32.totalorder %v601, %v471
      %v604 = vsel %vm602, 1, 0
      %v605 = vsel %vm603, 1, 0
      %v606 = vcvt.s32.f32 %v604
      %v607 = vcvt.s32.f32 %v605
      %608 = vmatpush.msra.mxu0 0.0
      %609 = vmatpush.msra.mxu0 0.0
      %610 = vmatpush.msra.mxu0 0.0
      %611 = vmatpush.msra.mxu0 0.0
      %612 = vmatpush.msra.mxu0 0.0
      %613 = vmatpush.msra.mxu0 0.0
      %614 = vmatpush.msra.mxu0 0.0
      %615 = vmatpush.msra.mxu0 0.0
      %616 = vmatpush.msra.mxu0 0.0
      %617 = vmatpush.msra.mxu0 0.0
      %618 = vmatpush.msra.mxu0 0.0
      %619 = vmatpush.msra.mxu0 0.0
      %620 = vmatpush.msra.mxu0 0.0
      %621 = vmatpush.msra.mxu0 0.0
      %622 = vmatpush.msra.mxu0 %v607
      %623 = vmatpush.msra.mxu0 %v606
      %624 = vmatmul.f32.gmra.mxu0 %v481
      %v625 = vpop.f32.mrf.mxu0
      %v626 = vadd.f32 0.0, %v625
      %627 = vmatmul.f32.gmra.mxu0 %v484
      %v628 = vpop.f32.mrf.mxu0
      %v629 = vadd.f32 0.0, %v628
      %630 = vmatmul.f32.gmra.mxu0 %v487
      %v631 = vpop.f32.mrf.mxu0
      %v632 = vadd.f32 0.0, %v631
      %633 = vmatmul.f32.gmra.mxu0 %v490
      %v634 = vpop.f32.mrf.mxu0
      %v635 = vadd.f32 0.0, %v634
      %636 = vdwg.mxu0
      %v637 = vmax.f32 %v597, %v626
      %v638 = vmax.f32 %v598, %v629
      %v639 = vmax.f32 %v599, %v632
      %v640 = vmax.f32 %v600, %v635
      %v641 = vperm.slane %v390, 4
      %vm642 = vcmp.eq.s32.totalorder %v641, %v470
      %vm643 = vcmp.eq.s32.totalorder %v641, %v471
      %v644 = vsel %vm642, 1, 0
      %v645 = vsel %vm643, 1, 0
      %v646 = vcvt.s32.f32 %v644
      %v647 = vcvt.s32.f32 %v645
      %648 = vmatpush.msra.mxu0 0.0
      %649 = vmatpush.msra.mxu0 0.0
      %650 = vmatpush.msra.mxu0 0.0
      %651 = vmatpush.msra.mxu0 0.0
      %652 = vmatpush.msra.mxu0 0.0
      %653 = vmatpush.msra.mxu0 0.0
      %654 = vmatpush.msra.mxu0 0.0
      %655 = vmatpush.msra.mxu0 0.0
      %656 = vmatpush.msra.mxu0 0.0
      %657 = vmatpush.msra.mxu0 0.0
      %658 = vmatpush.msra.mxu0 0.0
      %659 = vmatpush.msra.mxu0 0.0
      %660 = vmatpush.msra.mxu0 0.0
      %661 = vmatpush.msra.mxu0 0.0
      %662 = vmatpush.msra.mxu0 %v647
      %663 = vmatpush.msra.mxu0 %v646
      %664 = vmatmul.f32.gmra.mxu0 %v481
      %v665 = vpop.f32.mrf.mxu0
      %v666 = vadd.f32 0.0, %v665
      %667 = vmatmul.f32.gmra.mxu0 %v484
      %v668 = vpop.f32.mrf.mxu0
      %v669 = vadd.f32 0.0, %v668
      %670 = vmatmul.f32.gmra.mxu0 %v487
      %v671 = vpop.f32.mrf.mxu0
      %v672 = vadd.f32 0.0, %v671
      %673 = vmatmul.f32.gmra.mxu0 %v490
      %v674 = vpop.f32.mrf.mxu0
      %v675 = vadd.f32 0.0, %v674
      %676 = vdwg.mxu0
      %v677 = vmax.f32 %v637, %v666
      %v678 = vmax.f32 %v638, %v669
      %v679 = vmax.f32 %v639, %v672
      %v680 = vmax.f32 %v640, %v675
      %v681 = vperm.slane %v390, 5
      %vm682 = vcmp.eq.s32.totalorder %v681, %v470
      %vm683 = vcmp.eq.s32.totalorder %v681, %v471
      %v684 = vsel %vm682, 1, 0
      %v685 = vsel %vm683, 1, 0
      %v686 = vcvt.s32.f32 %v684
      %v687 = vcvt.s32.f32 %v685
      %688 = vmatpush.msra.mxu0 0.0
      %689 = vmatpush.msra.mxu0 0.0
      %690 = vmatpush.msra.mxu0 0.0
      %691 = vmatpush.msra.mxu0 0.0
      %692 = vmatpush.msra.mxu0 0.0
      %693 = vmatpush.msra.mxu0 0.0
      %694 = vmatpush.msra.mxu0 0.0
      %695 = vmatpush.msra.mxu0 0.0
      %696 = vmatpush.msra.mxu0 0.0
      %697 = vmatpush.msra.mxu0 0.0
      %698 = vmatpush.msra.mxu0 0.0
      %699 = vmatpush.msra.mxu0 0.0
      %700 = vmatpush.msra.mxu0 0.0
      %701 = vmatpush.msra.mxu0 0.0
      %702 = vmatpush.msra.mxu0 %v687
      %703 = vmatpush.msra.mxu0 %v686
      %704 = vmatmul.f32.gmra.mxu0 %v481
      %v705 = vpop.f32.mrf.mxu0
      %v706 = vadd.f32 0.0, %v705
      %707 = vmatmul.f32.gmra.mxu0 %v484
      %v708 = vpop.f32.mrf.mxu0
      %v709 = vadd.f32 0.0, %v708
      %710 = vmatmul.f32.gmra.mxu0 %v487
      %v711 = vpop.f32.mrf.mxu0
      %v712 = vadd.f32 0.0, %v711
      %713 = vmatmul.f32.gmra.mxu0 %v490
      %v714 = vpop.f32.mrf.mxu0
      %v715 = vadd.f32 0.0, %v714
      %716 = vdwg.mxu0
      %v717 = vmax.f32 %v677, %v706
      %v718 = vmax.f32 %v678, %v709
      %v719 = vmax.f32 %v679, %v712
      %v720 = vmax.f32 %v680, %v715
      %v721 = vperm.slane %v390, 6
      %vm722 = vcmp.eq.s32.totalorder %v721, %v470
      %vm723 = vcmp.eq.s32.totalorder %v721, %v471
      %v724 = vsel %vm722, 1, 0
      %v725 = vsel %vm723, 1, 0
      %v726 = vcvt.s32.f32 %v724
      %v727 = vcvt.s32.f32 %v725
      %728 = vmatpush.msra.mxu0 0.0
      %729 = vmatpush.msra.mxu0 0.0
      %730 = vmatpush.msra.mxu0 0.0
      %731 = vmatpush.msra.mxu0 0.0
      %732 = vmatpush.msra.mxu0 0.0
      %733 = vmatpush.msra.mxu0 0.0
      %734 = vmatpush.msra.mxu0 0.0
      %735 = vmatpush.msra.mxu0 0.0
      %736 = vmatpush.msra.mxu0 0.0
      %737 = vmatpush.msra.mxu0 0.0
      %738 = vmatpush.msra.mxu0 0.0
      %739 = vmatpush.msra.mxu0 0.0
      %740 = vmatpush.msra.mxu0 0.0
      %741 = vmatpush.msra.mxu0 0.0
      %742 = vmatpush.msra.mxu0 %v727
      %743 = vmatpush.msra.mxu0 %v726
      %744 = vmatmul.f32.gmra.mxu0 %v481
      %v745 = vpop.f32.mrf.mxu0
      %v746 = vadd.f32 0.0, %v745
      %747 = vmatmul.f32.gmra.mxu0 %v484
      %v748 = vpop.f32.mrf.mxu0
      %v749 = vadd.f32 0.0, %v748
      %750 = vmatmul.f32.gmra.mxu0 %v487
      %v751 = vpop.f32.mrf.mxu0
      %v752 = vadd.f32 0.0, %v751
      %753 = vmatmul.f32.gmra.mxu0 %v490
      %v754 = vpop.f32.mrf.mxu0
      %v755 = vadd.f32 0.0, %v754
      %756 = vdwg.mxu0
      %v757 = vmax.f32 %v717, %v746
      %v758 = vmax.f32 %v718, %v749
      %v759 = vmax.f32 %v719, %v752
      %v760 = vmax.f32 %v720, %v755
      %v761 = vperm.slane %v390, 7
      %vm762 = vcmp.eq.s32.totalorder %v761, %v470
      %vm763 = vcmp.eq.s32.totalorder %v761, %v471
      %v764 = vsel %vm762, 1, 0
      %v765 = vsel %vm763, 1, 0
      %v766 = vcvt.s32.f32 %v764
      %v767 = vcvt.s32.f32 %v765
      %768 = vmatpush.msra.mxu0 0.0
      %769 = vmatpush.msra.mxu0 0.0
      %770 = vmatpush.msra.mxu0 0.0
      %771 = vmatpush.msra.mxu0 0.0
      %772 = vmatpush.msra.mxu0 0.0
      %773 = vmatpush.msra.mxu0 0.0
      %774 = vmatpush.msra.mxu0 0.0
      %775 = vmatpush.msra.mxu0 0.0
      %776 = vmatpush.msra.mxu0 0.0
      %777 = vmatpush.msra.mxu0 0.0
      %778 = vmatpush.msra.mxu0 0.0
      %779 = vmatpush.msra.mxu0 0.0
      %780 = vmatpush.msra.mxu0 0.0
      %781 = vmatpush.msra.mxu0 0.0
      %782 = vmatpush.msra.mxu0 %v767
      %783 = vmatpush.msra.mxu0 %v766
      %784 = vmatmul.f32.gmra.mxu0 %v481
      %v785 = vpop.f32.mrf.mxu0
      %v786 = vadd.f32 0.0, %v785
      %787 = vmatmul.f32.gmra.mxu0 %v484
      %v788 = vpop.f32.mrf.mxu0
      %v789 = vadd.f32 0.0, %v788
      %790 = vmatmul.f32.gmra.mxu0 %v487
      %v791 = vpop.f32.mrf.mxu0
      %v792 = vadd.f32 0.0, %v791
      %793 = vmatmul.f32.gmra.mxu0 %v490
      %v794 = vpop.f32.mrf.mxu0
      %v795 = vadd.f32 0.0, %v794
      %796 = vdwg.mxu0
      %v797 = vmax.f32 %v757, %v786
      %v798 = vmax.f32 %v758, %v789
      %v799 = vmax.f32 %v759, %v792
      %v800 = vmax.f32 %v760, %v795
      %v801 = vadd.f32 %v797, %v454
      %v802 = vadd.f32 %v798, %v457
      %v803 = vadd.f32 %v799, %v460
      %v804 = vadd.f32 %v800, %v463
      %vm805 = vcmp.ge.f32.partialorder %v801, 0.0
      %vm806 = vcmp.ge.f32.partialorder %v802, 0.0
      %vm807 = vcmp.ge.f32.partialorder %v803, 0.0
      %vm808 = vcmp.ge.f32.partialorder %v804, 0.0
      %v809 = vmul.f32 %v801, 0.2
      %v810 = vmul.f32 %v802, 0.2
      %v811 = vmul.f32 %v803, 0.2
      %v812 = vmul.f32 %v804, 0.2
      %v813 = vsel %vm805, %v801, %v809
      %v814 = vsel %vm806, %v802, %v810
      %v815 = vsel %vm807, %v803, %v811
      %v816 = vsel %vm808, %v804, %v812
      %817 = vst.msk [vmem:[%s330] sm:$0xff] %vm479, %v813
      %818 = vst.msk [vmem:[%s330 + $0x8] sm:$0xff] %vm479, %v814
      %819 = vst.msk [vmem:[%s330 + $0x10] sm:$0xff] %vm479, %v815
      %820 = vst.msk [vmem:[%s330 + $0x18] sm:$0xff] %vm479, %v816
      %p821 = scmp.lt.s32.totalorder %s21, 1
      %s822 = scalar_select %p821, %s21, 1
      %p823 = scmp.lt.s32.totalorder %s22, 0
      %s824 = scalar_select %p823, %s22, 0
      %s825 = smul.addr %s822, 4
      %s826 = sadd.s32 %s824, %s825
      %s827 = smul.addr %s826, 8
      %s828 = scalar_lea.vmem %s6, %s827
      // Predicated region
      $region49: #{local_embedder_forward.7} parent=43 // pred_check
        %p829 = pneg %p194
      $region50: #{local_embedder_forward.7} parent=43 // pred_check_branch
        %831 = sbr.rel (%p829) target = $region52
      $region51: #{local_embedder_forward.7} parent=43 // pred_region
        _
      $region52: #{local_embedder_forward.7} parent=43 // pred_fallthru
        _
    $region44: #{local_embedder_forward.7} parent=5 // pred_fallthru
      _
    %p832 = scmp.le.s32.totalorder 2, %s12
    // Predicated region
    $region53: #{local_embedder_forward.7} parent=5 // pred_check
      %p833 = pneg %p832
    $region54: #{local_embedder_forward.7} parent=5 // pred_check_branch
      %835 = sbr.rel (%p833) target = $region56
    $region55: #{local_embedder_forward.7} parent=5 // pred_region
      %s836 = ssub.s32 %s12, 2
      // Predicated region
      $region57: #{local_embedder_forward.7} parent=55 // pred_check
        %p837 = pneg %p200
      $region58: #{local_embedder_forward.7} parent=55 // pred_check_branch
        %839 = sbr.rel (%p837) target = $region60
      $region59: #{local_embedder_forward.7} parent=55 // pred_region
        %p840 = scmp.lt.s32.totalorder %s23, 1
        %s841 = scalar_select %p840, %s23, 1
        %p842 = scmp.lt.s32.totalorder %s24, 0
        %s843 = scalar_select %p842, %s24, 0
        %s844 = smul.addr %s841, 4
        %s845 = sadd.s32 %s843, %s844
        %s846 = smul.addr %s845, 8
        %s847 = scalar_lea.vmem %s6, %s846
      $region60: #{local_embedder_forward.7} parent=55 // pred_fallthru
        _
    $region56: #{local_embedder_forward.7} parent=5 // pred_fallthru
      _
  $region6: #{local_embedder_forward.7} parent=0 // loop_footer
    %s16 = sadd.s32 1, %s12
  $region7: #{local_embedder_forward.7} parent=0 // loop_footer_branch
    %11 = sbr.rel target = $region3
  $region8: #{local_embedder_forward.7} parent=0 // loop_exit
    _

// kernel: local_embedder_forward.5
$region0: #{local_embedder_forward.5}
  #allocation0 [shape = 'u32[]', space=smem, size = 0x4, offset = 0x4, fixed_abs, tag = 'smem constant byte address 0x4 - core index']
  #allocation1 [shape = 'u32[72,128]{1,0:T(1,128)}', space=vmem, size = 0x9000, scoped, tag = 'internal scratch']
  #allocation2 [shape = 'f32[32,16]{1,0:T(8,128)}', space=vmem, size = 0x4000, scoped, tag = 'scratch operand']
  %s0 = inlined_call_operand.vmem [shape: s32[2,8,16], index: 0, kind: input, shape index: {}]
  %s1 = inlined_call_operand.vmem [shape: f32[2,4,16], index: 1, kind: input, shape index: {}, may-alias: {1,2}]
  %s2 = inlined_call_operand.vmem [shape: f32[2,4,16], index: 2, kind: input, shape index: {}, may-alias: {1,2}]
  %s3 = inlined_call_operand.vmem [shape: f32[32,4], index: 3, kind: input, shape index: {}]
  %s4 = inlined_call_operand.vmem [shape: f32[32,4], index: 4, kind: input, shape index: {}]
  %s5 = inlined_call_operand.vmem [shape: f32[32,1], index: 5, kind: input, shape index: {}]
  %s6 = inlined_call_operand.vmem [shape: f32[2,32,16], index: 6, kind: output, shape index: {}]
  %s7 = sld [smem:[#allocation0]]
  $region61: #{local_embedder_forward.5} parent=0
    _
  %s9 = ssub.s32 1, %s7
  %s10 = scalar_select 0, %s9, %s7
  loop: start=0, step=1, limit=4
  $region2: #{local_embedder_forward.5} parent=0 // loop_pre_header
    _
  $region3: #{local_embedder_forward.5} parent=0 // loop_header
    %s12 = sphi 0, %s16
    %p13 = scmp.ge.s32.totalorder %s12, 4
    %s19 = sphi 0, %s31
    %s20 = sphi 0, %s27
    %s21 = sphi 0, %s19
    %s22 = sphi 0, %s20
    %s23 = sphi 0, %s21
    %s24 = sphi 0, %s22
    %s36 = sphi 0, %s38
    %s39 = sphi 0, %s36
    %s40 = sphi 0, %s39
    %s56 = sphi 0, %s40
    %s62 = sphi 0, %s64
    %s65 = sphi 0, %s62
    %s66 = sphi 0, %s65
    %s82 = sphi 0, %s66
    %s90 = sphi 0, %s92
    %s93 = sphi 0, %s90
    %s94 = sphi 0, %s93
    %s110 = sphi 0, %s94
    %s114 = sphi 0, %s114
    %s116 = sphi 0, %s114
    %s117 = sphi 0, %s116
    %s131 = sphi 0, %s117
    %s135 = sphi 0, %s135
    %s137 = sphi 0, %s135
    %s138 = sphi 0, %s137
    %s152 = sphi 0, %s138
    %s156 = sphi 0, %s156
    %s158 = sphi 0, %s156
    %s159 = sphi 0, %s158
    %s173 = sphi 0, %s159
    %s181 = sphi 0, %s183
    %s184 = sphi 0, %s181
    %s185 = sphi 0, %s184
    %s201 = sphi 0, %s185
  $region4: #{local_embedder_forward.5} parent=0 // loop_header_branch
    %15 = sbr.rel (%p13) target = $region8
  $region5: #{local_embedder_forward.5} parent=0 // loop_body
    %s17 = ssub.s32 %s12, 1
    %s18 = ssub.s32 %s12, 2
    %s25 = sadd.s32 1, %s20
    %p26 = scmp.ge.s32.totalorder %s25, 1
    %s27 = scalar_select %p26, 0, %s25
    %s28 = sadd.s32 1, %s19
    %s29 = scalar_select %p26, %s28, %s19
    %p30 = scmp.ge.s32.totalorder %s29, 2
    %s31 = scalar_select %p30, 0, %s29
    %s32 = ssub.s32 %s19, %s31
    %s33 = ssub.s32 %s20, %s27
    %s34 = sor.u32 %s32, %s33
    %p35 = scmp.eq.s32.totalorder %s34, 0
    %s37 = sadd.s32 %s36, 1
    %s38 = scalar_select %p35, %s36, %s37
    %p41 = pneg %p35
    %p42 = scmp.eq.s32.totalorder %s12, 1
    %p43 = por %p41, %p42
    %p44 = scmp.ne.s32.totalorder %s36, %s39
    %p45 = scmp.eq.s32.totalorder %s12, 0
    %p46 = por %p44, %p45
    %p47 = scmp.ne.s32.totalorder %s36, %s39
    %p48 = scmp.eq.s32.totalorder %s17, 1
    %p49 = por %p47, %p48
    %p50 = scmp.ne.s32.totalorder %s39, %s40
    %p51 = scmp.eq.s32.totalorder %s17, 0
    %p52 = por %p50, %p51
    %p53 = scmp.ne.s32.totalorder %s39, %s40
    %p54 = scmp.eq.s32.totalorder %s18, 1
    %p55 = por %p53, %p54
    %p57 = scmp.ne.s32.totalorder %s40, %s56
    %p58 = scmp.eq.s32.totalorder %s18, 0
    %p59 = por %p57, %p58
    %s60 = ssub.s32 %s19, %s31
    %p61 = scmp.eq.s32.totalorder %s60, 0
    %s63 = sadd.s32 %s62, 1
    %s64 = scalar_select %p61, %s62, %s63
    %p67 = pneg %p61
    %p68 = scmp.eq.s32.totalorder %s12, 1
    %p69 = por %p67, %p68
    %p70 = scmp.ne.s32.totalorder %s62, %s65
    %p71 = scmp.eq.s32.totalorder %s12, 0
    %p72 = por %p70, %p71
    %p73 = scmp.ne.s32.totalorder %s62, %s65
    %p74 = scmp.eq.s32.totalorder %s17, 1
    %p75 = por %p73, %p74
    %p76 = scmp.ne.s32.totalorder %s65, %s66
    %p77 = scmp.eq.s32.totalorder %s17, 0
    %p78 = por %p76, %p77
    %p79 = scmp.ne.s32.totalorder %s65, %s66
    %p80 = scmp.eq.s32.totalorder %s18, 1
    %p81 = por %p79, %p80
    %p83 = scmp.ne.s32.totalorder %s66, %s82
    %p84 = scmp.eq.s32.totalorder %s18, 0
    %p85 = por %p83, %p84
    %s86 = ssub.s32 %s19, %s31
    %s87 = ssub.s32 %s20, %s27
    %s88 = sor.u32 %s86, %s87
    %p89 = scmp.eq.s32.totalorder %s88, 0
    %s91 = sadd.s32 %s90, 1
    %s92 = scalar_select %p89, %s90, %s91
    %p95 = pneg %p89
    %p96 = scmp.eq.s32.totalorder %s12, 1
    %p97 = por %p95, %p96
    %p98 = scmp.ne.s32.totalorder %s90, %s93
    %p99 = scmp.eq.s32.totalorder %s12, 0
    %p100 = por %p98, %p99
    %p101 = scmp.ne.s32.totalorder %s90, %s93
    %p102 = scmp.eq.s32.totalorder %s17, 1
    %p103 = por %p101, %p102
    %p104 = scmp.ne.s32.totalorder %s93, %s94
    %p105 = scmp.eq.s32.totalorder %s17, 0
    %p106 = por %p104, %p105
    %p107 = scmp.ne.s32.totalorder %s93, %s94
    %p108 = scmp.eq.s32.totalorder %s18, 1
    %p109 = por %p107, %p108
    %p111 = scmp.ne.s32.totalorder %s94, %s110
    %p112 = scmp.eq.s32.totalorder %s18, 0
    %p113 = por %p111, %p112
    %s115 = sadd.s32 %s114, 1
    %p118 = scmp.eq.s32.totalorder %s12, 1
    %p119 = scmp.ne.s32.totalorder %s114, %s116
    %p120 = scmp.eq.s32.totalorder %s12, 0
    %p121 = por %p119, %p120
    %p122 = scmp.ne.s32.totalorder %s114, %s116
    %p123 = scmp.eq.s32.totalorder %s17, 1
    %p124 = por %p122, %p123
    %p125 = scmp.ne.s32.totalorder %s116, %s117
    %p126 = scmp.eq.s32.totalorder %s17, 0
    %p127 = por %p125, %p126
    %p128 = scmp.ne.s32.totalorder %s116, %s117
    %p129 = scmp.eq.s32.totalorder %s18, 1
    %p130 = por %p128, %p129
    %p132 = scmp.ne.s32.totalorder %s117, %s131
    %p133 = scmp.eq.s32.totalorder %s18, 0
    %p134 = por %p132, %p133
    %s136 = sadd.s32 %s135, 1
    %p139 = scmp.eq.s32.totalorder %s12, 1
    %p140 = scmp.ne.s32.totalorder %s135, %s137
    %p141 = scmp.eq.s32.totalorder %s12, 0
    %p142 = por %p140, %p141
    %p143 = scmp.ne.s32.totalorder %s135, %s137
    %p144 = scmp.eq.s32.totalorder %s17, 1
    %p145 = por %p143, %p144
    %p146 = scmp.ne.s32.totalorder %s137, %s138
    %p147 = scmp.eq.s32.totalorder %s17, 0
    %p148 = por %p146, %p147
    %p149 = scmp.ne.s32.totalorder %s137, %s138
    %p150 = scmp.eq.s32.totalorder %s18, 1
    %p151 = por %p149, %p150
    %p153 = scmp.ne.s32.totalorder %s138, %s152
    %p154 = scmp.eq.s32.totalorder %s18, 0
    %p155 = por %p153, %p154
    %s157 = sadd.s32 %s156, 1
    %p160 = scmp.eq.s32.totalorder %s12, 1
    %p161 = scmp.ne.s32.totalorder %s156, %s158
    %p162 = scmp.eq.s32.totalorder %s12, 0
    %p163 = por %p161, %p162
    %p164 = scmp.ne.s32.totalorder %s156, %s158
    %p165 = scmp.eq.s32.totalorder %s17, 1
    %p166 = por %p164, %p165
    %p167 = scmp.ne.s32.totalorder %s158, %s159
    %p168 = scmp.eq.s32.totalorder %s17, 0
    %p169 = por %p167, %p168
    %p170 = scmp.ne.s32.totalorder %s158, %s159
    %p171 = scmp.eq.s32.totalorder %s18, 1
    %p172 = por %p170, %p171
    %p174 = scmp.ne.s32.totalorder %s159, %s173
    %p175 = scmp.eq.s32.totalorder %s18, 0
    %p176 = por %p174, %p175
    %s177 = ssub.s32 %s19, %s31
    %s178 = ssub.s32 %s20, %s27
    %s179 = sor.u32 %s177, %s178
    %p180 = scmp.eq.s32.totalorder %s179, 0
    %s182 = sadd.s32 %s181, 1
    %s183 = scalar_select %p180, %s181, %s182
    %p186 = pneg %p180
    %p187 = scmp.eq.s32.totalorder %s12, 1
    %p188 = por %p186, %p187
    %p189 = scmp.ne.s32.totalorder %s181, %s184
    %p190 = scmp.eq.s32.totalorder %s12, 0
    %p191 = por %p189, %p190
    %p192 = scmp.ne.s32.totalorder %s181, %s184
    %p193 = scmp.eq.s32.totalorder %s17, 1
    %p194 = por %p192, %p193
    %p195 = scmp.ne.s32.totalorder %s184, %s185
    %p196 = scmp.eq.s32.totalorder %s17, 0
    %p197 = por %p195, %p196
    %p198 = scmp.ne.s32.totalorder %s184, %s185
    %p199 = scmp.eq.s32.totalorder %s18, 1
    %p200 = por %p198, %p199
    %p202 = scmp.ne.s32.totalorder %s185, %s201
    %p203 = scmp.eq.s32.totalorder %s18, 0
    %p204 = por %p202, %p203
    %p205 = scmp.le.s32.totalorder 1, %s12
    %p206 = scmp.lt.s32.totalorder %s12, 3
    %p207 = pnand %p205, %p206
    %p208 = pneg %p207
    // Predicated region
    $region9: #{local_embedder_forward.5} parent=5 // pred_check
      _
    $region10: #{local_embedder_forward.5} parent=5 // pred_check_branch
      %210 = sbr.rel (%p207) target = $region12
    $region11: #{local_embedder_forward.5} parent=5 // pred_region
      %s211 = ssub.s32 %s12, 1
      // Predicated region
      $region13: #{local_embedder_forward.5} parent=11 // pred_check
        %p212 = pneg %p127
      $region14: #{local_embedder_forward.5} parent=11 // pred_check_branch
        %214 = sbr.rel (%p212) target = $region16
      $region15: #{local_embedder_forward.5} parent=11 // pred_region
        _
      $region16: #{local_embedder_forward.5} parent=11 // pred_fallthru
        _
      // Predicated region
      $region17: #{local_embedder_forward.5} parent=11 // pred_check
        %p215 = pneg %p148
      $region18: #{local_embedder_forward.5} parent=11 // pred_check_branch
        %217 = sbr.rel (%p215) target = $region20
      $region19: #{local_embedder_forward.5} parent=11 // pred_region
        _
      $region20: #{local_embedder_forward.5} parent=11 // pred_fallthru
        _
      // Predicated region
      $region21: #{local_embedder_forward.5} parent=11 // pred_check
        %p218 = pneg %p169
      $region22: #{local_embedder_forward.5} parent=11 // pred_check_branch
        %220 = sbr.rel (%p218) target = $region24
      $region23: #{local_embedder_forward.5} parent=11 // pred_region
        _
      $region24: #{local_embedder_forward.5} parent=11 // pred_fallthru
        _
    $region12: #{local_embedder_forward.5} parent=5 // pred_fallthru
      _
    %p221 = scmp.lt.s32.totalorder %s12, 2
    // Predicated region
    $region25: #{local_embedder_forward.5} parent=5 // pred_check
      %p222 = pneg %p221
    $region26: #{local_embedder_forward.5} parent=5 // pred_check_branch
      %224 = sbr.rel (%p222) target = $region28
    $region27: #{local_embedder_forward.5} parent=5 // pred_region
      // Predicated region
      $region29: #{local_embedder_forward.5} parent=27 // pred_check
        %p225 = pneg %p46
      $region30: #{local_embedder_forward.5} parent=27 // pred_check_branch
        %227 = sbr.rel (%p225) target = $region32
      $region31: #{local_embedder_forward.5} parent=27 // pred_region
        %p228 = scmp.lt.s32.totalorder %s19, 1
        %s229 = scalar_select %p228, %s19, 1
        %p230 = scmp.lt.s32.totalorder %s20, 0
        %s231 = scalar_select %p230, %s20, 0
        %s232 = sadd.s32 %s231, %s229
        %s233 = smul.addr %s232, 8
        %s234 = scalar_lea.vmem %s0, %s233
      $region32: #{local_embedder_forward.5} parent=27 // pred_fallthru
        _
      // Predicated region
      $region33: #{local_embedder_forward.5} parent=27 // pred_check
        %p235 = pneg %p72
      $region34: #{local_embedder_forward.5} parent=27 // pred_check_branch
        %237 = sbr.rel (%p235) target = $region36
      $region35: #{local_embedder_forward.5} parent=27 // pred_region
        %p238 = scmp.lt.s32.totalorder %s19, 1
        %s239 = scalar_select %p238, %s19, 1
        %s240 = smul.addr %s239, 4
        %s241 = scalar_lea.vmem %s1, %s240
      $region36: #{local_embedder_forward.5} parent=27 // pred_fallthru
        _
      // Predicated region
      $region37: #{local_embedder_forward.5} parent=27 // pred_check
        %p242 = pneg %p100
      $region38: #{local_embedder_forward.5} parent=27 // pred_check_branch
        %244 = sbr.rel (%p242) target = $region40
      $region39: #{local_embedder_forward.5} parent=27 // pred_region
        %p245 = scmp.lt.s32.totalorder %s19, 1
        %s246 = scalar_select %p245, %s19, 1
        %p247 = scmp.lt.s32.totalorder %s20, 0
        %s248 = scalar_select %p247, %s20, 0
        %s249 = sadd.s32 %s248, %s246
        %s250 = smul.addr %s249, 4
        %s251 = scalar_lea.vmem %s2, %s250
      $region40: #{local_embedder_forward.5} parent=27 // pred_fallthru
        _
    $region28: #{local_embedder_forward.5} parent=5 // pred_fallthru
      _
    %p252 = scmp.le.s32.totalorder 1, %s12
    %p253 = scmp.lt.s32.totalorder %s12, 3
    %p254 = pnand %p252, %p253
    %p255 = pneg %p254
    // Predicated region
    $region41: #{local_embedder_forward.5} parent=5 // pred_check
      _
    $region42: #{local_embedder_forward.5} parent=5 // pred_check_branch
      %257 = sbr.rel (%p254) target = $region44
    $region43: #{local_embedder_forward.5} parent=5 // pred_region
      %s258 = ssub.s32 %s12, 1
      %p259 = scmp.lt.s32.totalorder %s21, 1
      %s260 = scalar_select %p259, %s21, 1
      %p261 = scmp.lt.s32.totalorder %s22, 0
      %s262 = scalar_select %p261, %s22, 0
      %s263 = sadd.s32 %s262, %s260
      %s264 = smul.addr %s263, 8
      %s265 = scalar_lea.vmem %s0, %s264
      %p266 = pneg %p52
      %p267 = pneg %p49
      %p268 = scmp.lt.s32.totalorder %s21, 1
      %s269 = scalar_select %p268, %s21, 1
      %s270 = smul.addr %s269, 4
      %s271 = scalar_lea.vmem %s1, %s270
      %p272 = pneg %p78
      %p273 = pneg %p75
      %p274 = scmp.lt.s32.totalorder %s21, 1
      %s275 = scalar_select %p274, %s21, 1
      %p276 = scmp.lt.s32.totalorder %s22, 0
      %s277 = scalar_select %p276, %s22, 0
      %s278 = sadd.s32 %s277, %s275
      %s279 = smul.addr %s278, 4
      %s280 = scalar_lea.vmem %s2, %s279
      %p281 = pneg %p106
      %p282 = pneg %p103
      %p283 = pneg %p127
      %p284 = pneg %p124
      %p285 = pneg %p148
      %p286 = pneg %p145
      %p287 = pneg %p169
      %p288 = pneg %p166
      %p289 = pneg %p197
      %p290 = pneg %p194
      %p291 = scmp.lt.s32.totalorder %s21, 1
      %s292 = scalar_select %p291, %s21, 1
      %p293 = scmp.lt.s32.totalorder %s22, 0
      %s294 = scalar_select %p293, %s22, 0
      %s295 = smul.addr %s292, 4
      %s296 = sadd.s32 %s294, %s295
      %s297 = smul.addr %s296, 8
      %s298 = scalar_lea.vmem %s6, %s297
      %p299 = scmp.lt.s32.totalorder %s21, 1
      %s300 = scalar_select %p299, %s21, 1
      %p301 = scmp.lt.s32.totalorder %s22, 0
      %s302 = scalar_select %p301, %s22, 0
      %s303 = sadd.s32 %s302, %s300
      %s304 = smul.addr %s303, 8
      %s305 = scalar_lea.vmem %s0, %s304
      %p306 = scmp.lt.s32.totalorder %s21, 1
      %s307 = scalar_select %p306, %s21, 1
      %s308 = smul.addr %s307, 4
      %s309 = scalar_lea.vmem %s1, %s308
      %p310 = scmp.lt.s32.totalorder %s21, 1
      %s311 = scalar_select %p310, %s21, 1
      %p312 = scmp.lt.s32.totalorder %s22, 0
      %s313 = scalar_select %p312, %s22, 0
      %s314 = sadd.s32 %s313, %s311
      %s315 = smul.addr %s314, 4
      %s316 = scalar_lea.vmem %s2, %s315
      %p317 = scmp.lt.s32.totalorder %s21, 1
      %s318 = scalar_select %p317, %s21, 1
      %p319 = scmp.lt.s32.totalorder %s22, 0
      %s320 = scalar_select %p319, %s22, 0
      %s321 = smul.addr %s318, 4
      %s322 = sadd.s32 %s320, %s321
      %s323 = smul.addr %s322, 8
      %s324 = scalar_lea.vmem %s6, %s323
      %p325 = scmp.eq.s32.totalorder %s22, 0
      // Predicated region
      $region45: #{local_embedder_forward.5} parent=43 // pred_check
        %p326 = pneg %p325
      $region46: #{local_embedder_forward.5} parent=43 // pred_check_branch
        %328 = sbr.rel (%p326) target = $region48
      $region47: #{local_embedder_forward.5} parent=43 // pred_region
        %v329 = vld [vmem:[%s3] sm:$0xff]
        %v330 = vld [vmem:[%s3 + $0x8] sm:$0xff]
        %v331 = vld [vmem:[%s3 + $0x10] sm:$0xff]
        %v332 = vld [vmem:[%s3 + $0x18] sm:$0xff]
        %v333 = vld [vmem:[%s309] sm:$0xf]
        %vm334 = vcmask 31744
        %v336 = vsel %vm334, %v329, 0
        %v339 = vsel %vm334, %v330, 0
        %v342 = vsel %vm334, %v331, 0
        %v345 = vsel %vm334, %v332, 0
        %vm347 = vcmask 1043456
        %v349 = vsel %vm347, %v333, 0
        %351 = vmatpush.msra.mxu0 0.0
        %352 = vmatpush.msra.mxu0 0.0
        %353 = vmatpush.msra.mxu0 0.0
        %354 = vmatpush.msra.mxu0 0.0
        %355 = vmatpush.msra.mxu0 0.0
        %356 = vmatpush.msra.mxu0 0.0
        %357 = vmatpush.msra.mxu0 0.0
        %358 = vmatpush.msra.mxu0 0.0
        %359 = vmatpush.msra.mxu0 0.0
        %360 = vmatpush.msra.mxu0 0.0
        %361 = vmatpush.msra.mxu0 0.0
        %362 = vmatpush.msra.mxu0 0.0
        %363 = vmatpush.msra.mxu0 0.0
        %364 = vmatpush.msra.mxu0 0.0
        %365 = vmatpush.msra.mxu0 0.0
        %366 = vmatpush.msra.mxu0 %v349
        %367 = vmatmul.f32.gmra.mxu0 %v336
        %v368 = vpop.f32.mrf.mxu0
        %v369 = vadd.f32 0.0, %v368
        %370 = vmatmul.f32.gmra.mxu0 %v339
        %v371 = vpop.f32.mrf.mxu0
        %v372 = vadd.f32 0.0, %v371
        %373 = vmatmul.f32.gmra.mxu0 %v342
        %v374 = vpop.f32.mrf.mxu0
        %v375 = vadd.f32 0.0, %v374
        %376 = vmatmul.f32.gmra.mxu0 %v345
        %v377 = vpop.f32.mrf.mxu0
        %v378 = vadd.f32 0.0, %v377
        %379 = vdwg.mxu0
        %vm380 = vcmask 130048
        %381 = vst.msk [vmem:[#allocation2] sm:$0xff] %vm380, %v369
        %382 = vst.msk [vmem:[#allocation2 + $0x8] sm:$0xff] %vm380, %v372
        %383 = vst.msk [vmem:[#allocation2 + $0x10] sm:$0xff] %vm380, %v375
        %384 = vst.msk [vmem:[#allocation2 + $0x18] sm:$0xff] %vm380, %v378
      $region48: #{local_embedder_forward.5} parent=43 // pred_fallthru
        _
      %v385 = vld [vmem:[%s305] sm:$0xff]
      %v386 = vld [vmem:[%s4] sm:$0xff]
      %v387 = vld [vmem:[%s4 + $0x8] sm:$0xff]
      %v388 = vld [vmem:[%s4 + $0x10] sm:$0xff]
      %v389 = vld [vmem:[%s4 + $0x18] sm:$0xff]
      %v390 = vld [vmem:[%s316] sm:$0xf]
      %v391 = vld [vmem:[%s5] sm:$0xff]
      %v392 = vld [vmem:[%s5 + $0x8] sm:$0xff]
      %v393 = vld [vmem:[%s5 + $0x10] sm:$0xff]
      %v394 = vld [vmem:[%s5 + $0x18] sm:$0xff]
      %396 = vset.pattern.permute.xlu0 0
      %397 = vperm.xlu0 %396, %v391
      %v398 = vpop.permute.xlu0 %397
      %401 = vset.pattern.permute.xlu0 0
      %402 = vperm.xlu0 %401, %v392
      %v403 = vpop.permute.xlu0 %402
      %406 = vset.pattern.permute.xlu0 0
      %407 = vperm.xlu0 %406, %v393
      %v408 = vpop.permute.xlu0 %407
      %411 = vset.pattern.permute.xlu0 0
      %412 = vperm.xlu0 %411, %v394
      %v413 = vpop.permute.xlu0 %412
      %vm415 = vcmask 31744
      %v417 = vsel %vm415, %v386, 0
      %v420 = vsel %vm415, %v387, 0
      %v423 = vsel %vm415, %v388, 0
      %v426 = vsel %vm415, %v389, 0
      %vm428 = vcmask 1043456
      %v430 = vsel %vm428, %v390, 0
      %432 = vmatpush.msra.mxu0 0.0
      %433 = vmatpush.msra.mxu0 0.0
      %434 = vmatpush.msra.mxu0 0.0
      %435 = vmatpush.msra.mxu0 0.0
      %436 = vmatpush.msra.mxu0 0.0
      %437 = vmatpush.msra.mxu0 0.0
      %438 = vmatpush.msra.mxu0 0.0
      %439 = vmatpush.msra.mxu0 0.0
      %440 = vmatpush.msra.mxu0 0.0
      %441 = vmatpush.msra.mxu0 0.0
      %442 = vmatpush.msra.mxu0 0.0
      %443 = vmatpush.msra.mxu0 0.0
      %444 = vmatpush.msra.mxu0 0.0
      %445 = vmatpush.msra.mxu0 0.0
      %446 = vmatpush.msra.mxu0 0.0
      %447 = vmatpush.msra.mxu0 %v430
      %448 = vmatmul.f32.gmra.mxu0 %v417
      %v449 = vpop.f32.mrf.mxu0
      %v450 = vadd.f32 %v398, %v449
      %451 = vmatmul.f32.gmra.mxu0 %v420
      %v452 = vpop.f32.mrf.mxu0
      %v453 = vadd.f32 %v403, %v452
      %454 = vmatmul.f32.gmra.mxu0 %v423
      %v455 = vpop.f32.mrf.mxu0
      %v456 = vadd.f32 %v408, %v455
      %457 = vmatmul.f32.gmra.mxu0 %v426
      %v458 = vpop.f32.mrf.mxu0
      %v459 = vadd.f32 %v413, %v458
      %460 = vdwg.mxu0
      %v461 = vld [vmem:[#allocation2] sm:$0xff]
      %v462 = vld [vmem:[#allocation2 + $0x8] sm:$0xff]
      %v463 = vld [vmem:[#allocation2 + $0x10] sm:$0xff]
      %v464 = vld [vmem:[#allocation2 + $0x18] sm:$0xff]
      %v465 = vlaneseq
      %v466 = vshrl.u32 %v465, 7
      %v467 = vadd.s32 %v466, 8
      %v468 = vperm.slane %v385, 0
      %vm469 = vcmp.eq.s32.totalorder %v468, %v466
      %vm470 = vcmp.eq.s32.totalorder %v468, %v467
      %v471 = vsel %vm469, 1, 0
      %v472 = vsel %vm470, 1, 0
      %v473 = vcvt.s32.f32 %v471
      %v474 = vcvt.s32.f32 %v472
      %vm475 = vcmask 130048
      %v477 = vsel %vm475, %v461, 0
      %v480 = vsel %vm475, %v462, 0
      %v483 = vsel %vm475, %v463, 0
      %v486 = vsel %vm475, %v464, 0
      %488 = vmatpush.msra.mxu0 0.0
      %489 = vmatpush.msra.mxu0 0.0
      %490 = vmatpush.msra.mxu0 0.0
      %491 = vmatpush.msra.mxu0 0.0
      %492 = vmatpush.msra.mxu0 0.0
      %493 = vmatpush.msra.mxu0 0.0
      %494 = vmatpush.msra.mxu0 0.0
      %495 = vmatpush.msra.mxu0 0.0
      %496 = vmatpush.msra.mxu0 0.0
      %497 = vmatpush.msra.mxu0 0.0
      %498 = vmatpush.msra.mxu0 0.0
      %499 = vmatpush.msra.mxu0 0.0
      %500 = vmatpush.msra.mxu0 0.0
      %501 = vmatpush.msra.mxu0 0.0
      %502 = vmatpush.msra.mxu0 %v474
      %503 = vmatpush.msra.mxu0 %v473
      %504 = vmatmul.f32.gmra.mxu0 %v477
      %v505 = vpop.f32.mrf.mxu0
      %v506 = vadd.f32 0.0, %v505
      %507 = vmatmul.f32.gmra.mxu0 %v480
      %v508 = vpop.f32.mrf.mxu0
      %v509 = vadd.f32 0.0, %v508
      %510 = vmatmul.f32.gmra.mxu0 %v483
      %v511 = vpop.f32.mrf.mxu0
      %v512 = vadd.f32 0.0, %v511
      %513 = vmatmul.f32.gmra.mxu0 %v486
      %v514 = vpop.f32.mrf.mxu0
      %v515 = vadd.f32 0.0, %v514
      %516 = vdwg.mxu0
      %v517 = vperm.slane %v385, 1
      %vm518 = vcmp.eq.s32.totalorder %v517, %v466
      %vm519 = vcmp.eq.s32.totalorder %v517, %v467
      %v520 = vsel %vm518, 1, 0
      %v521 = vsel %vm519, 1, 0
      %v522 = vcvt.s32.f32 %v520
      %v523 = vcvt.s32.f32 %v521
      %524 = vmatpush.msra.mxu0 0.0
      %525 = vmatpush.msra.mxu0 0.0
      %526 = vmatpush.msra.mxu0 0.0
      %527 = vmatpush.msra.mxu0 0.0
      %528 = vmatpush.msra.mxu0 0.0
      %529 = vmatpush.msra.mxu0 0.0
      %530 = vmatpush.msra.mxu0 0.0
      %531 = vmatpush.msra.mxu0 0.0
      %532 = vmatpush.msra.mxu0 0.0
      %533 = vmatpush.msra.mxu0 0.0
      %534 = vmatpush.msra.mxu0 0.0
      %535 = vmatpush.msra.mxu0 0.0
      %536 = vmatpush.msra.mxu0 0.0
      %537 = vmatpush.msra.mxu0 0.0
      %538 = vmatpush.msra.mxu0 %v523
      %539 = vmatpush.msra.mxu0 %v522
      %540 = vmatmul.f32.gmra.mxu0 %v477
      %v541 = vpop.f32.mrf.mxu0
      %v542 = vadd.f32 0.0, %v541
      %543 = vmatmul.f32.gmra.mxu0 %v480
      %v544 = vpop.f32.mrf.mxu0
      %v545 = vadd.f32 0.0, %v544
      %546 = vmatmul.f32.gmra.mxu0 %v483
      %v547 = vpop.f32.mrf.mxu0
      %v548 = vadd.f32 0.0, %v547
      %549 = vmatmul.f32.gmra.mxu0 %v486
      %v550 = vpop.f32.mrf.mxu0
      %v551 = vadd.f32 0.0, %v550
      %552 = vdwg.mxu0
      %v553 = vmax.f32 %v506, %v542
      %v554 = vmax.f32 %v509, %v545
      %v555 = vmax.f32 %v512, %v548
      %v556 = vmax.f32 %v515, %v551
      %v557 = vperm.slane %v385, 2
      %vm558 = vcmp.eq.s32.totalorder %v557, %v466
      %vm559 = vcmp.eq.s32.totalorder %v557, %v467
      %v560 = vsel %vm558, 1, 0
      %v561 = vsel %vm559, 1, 0
      %v562 = vcvt.s32.f32 %v560
      %v563 = vcvt.s32.f32 %v561
      %564 = vmatpush.msra.mxu0 0.0
      %565 = vmatpush.msra.mxu0 0.0
      %566 = vmatpush.msra.mxu0 0.0
      %567 = vmatpush.msra.mxu0 0.0
      %568 = vmatpush.msra.mxu0 0.0
      %569 = vmatpush.msra.mxu0 0.0
      %570 = vmatpush.msra.mxu0 0.0
      %571 = vmatpush.msra.mxu0 0.0
      %572 = vmatpush.msra.mxu0 0.0
      %573 = vmatpush.msra.mxu0 0.0
      %574 = vmatpush.msra.mxu0 0.0
      %575 = vmatpush.msra.mxu0 0.0
      %576 = vmatpush.msra.mxu0 0.0
      %577 = vmatpush.msra.mxu0 0.0
      %578 = vmatpush.msra.mxu0 %v563
      %579 = vmatpush.msra.mxu0 %v562
      %580 = vmatmul.f32.gmra.mxu0 %v477
      %v581 = vpop.f32.mrf.mxu0
      %v582 = vadd.f32 0.0, %v581
      %583 = vmatmul.f32.gmra.mxu0 %v480
      %v584 = vpop.f32.mrf.mxu0
      %v585 = vadd.f32 0.0, %v584
      %586 = vmatmul.f32.gmra.mxu0 %v483
      %v587 = vpop.f32.mrf.mxu0
      %v588 = vadd.f32 0.0, %v587
      %589 = vmatmul.f32.gmra.mxu0 %v486
      %v590 = vpop.f32.mrf.mxu0
      %v591 = vadd.f32 0.0, %v590
      %592 = vdwg.mxu0
      %v593 = vmax.f32 %v553, %v582
      %v594 = vmax.f32 %v554, %v585
      %v595 = vmax.f32 %v555, %v588
      %v596 = vmax.f32 %v556, %v591
      %v597 = vperm.slane %v385, 3
      %vm598 = vcmp.eq.s32.totalorder %v597, %v466
      %vm599 = vcmp.eq.s32.totalorder %v597, %v467
      %v600 = vsel %vm598, 1, 0
      %v601 = vsel %vm599, 1, 0
      %v602 = vcvt.s32.f32 %v600
      %v603 = vcvt.s32.f32 %v601
      %604 = vmatpush.msra.mxu0 0.0
      %605 = vmatpush.msra.mxu0 0.0
      %606 = vmatpush.msra.mxu0 0.0
      %607 = vmatpush.msra.mxu0 0.0
      %608 = vmatpush.msra.mxu0 0.0
      %609 = vmatpush.msra.mxu0 0.0
      %610 = vmatpush.msra.mxu0 0.0
      %611 = vmatpush.msra.mxu0 0.0
      %612 = vmatpush.msra.mxu0 0.0
      %613 = vmatpush.msra.mxu0 0.0
      %614 = vmatpush.msra.mxu0 0.0
      %615 = vmatpush.msra.mxu0 0.0
      %616 = vmatpush.msra.mxu0 0.0
      %617 = vmatpush.msra.mxu0 0.0
      %618 = vmatpush.msra.mxu0 %v603
      %619 = vmatpush.msra.mxu0 %v602
      %620 = vmatmul.f32.gmra.mxu0 %v477
      %v621 = vpop.f32.mrf.mxu0
      %v622 = vadd.f32 0.0, %v621
      %623 = vmatmul.f32.gmra.mxu0 %v480
      %v624 = vpop.f32.mrf.mxu0
      %v625 = vadd.f32 0.0, %v624
      %626 = vmatmul.f32.gmra.mxu0 %v483
      %v627 = vpop.f32.mrf.mxu0
      %v628 = vadd.f32 0.0, %v627
      %629 = vmatmul.f32.gmra.mxu0 %v486
      %v630 = vpop.f32.mrf.mxu0
      %v631 = vadd.f32 0.0, %v630
      %632 = vdwg.mxu0
      %v633 = vmax.f32 %v593, %v622
      %v634 = vmax.f32 %v594, %v625
      %v635 = vmax.f32 %v595, %v628
      %v636 = vmax.f32 %v596, %v631
      %v637 = vperm.slane %v385, 4
      %vm638 = vcmp.eq.s32.totalorder %v637, %v466
      %vm639 = vcmp.eq.s32.totalorder %v637, %v467
      %v640 = vsel %vm638, 1, 0
      %v641 = vsel %vm639, 1, 0
      %v642 = vcvt.s32.f32 %v640
      %v643 = vcvt.s32.f32 %v641
      %644 = vmatpush.msra.mxu0 0.0
      %645 = vmatpush.msra.mxu0 0.0
      %646 = vmatpush.msra.mxu0 0.0
      %647 = vmatpush.msra.mxu0 0.0
      %648 = vmatpush.msra.mxu0 0.0
      %649 = vmatpush.msra.mxu0 0.0
      %650 = vmatpush.msra.mxu0 0.0
      %651 = vmatpush.msra.mxu0 0.0
      %652 = vmatpush.msra.mxu0 0.0
      %653 = vmatpush.msra.mxu0 0.0
      %654 = vmatpush.msra.mxu0 0.0
      %655 = vmatpush.msra.mxu0 0.0
      %656 = vmatpush.msra.mxu0 0.0
      %657 = vmatpush.msra.mxu0 0.0
      %658 = vmatpush.msra.mxu0 %v643
      %659 = vmatpush.msra.mxu0 %v642
      %660 = vmatmul.f32.gmra.mxu0 %v477
      %v661 = vpop.f32.mrf.mxu0
      %v662 = vadd.f32 0.0, %v661
      %663 = vmatmul.f32.gmra.mxu0 %v480
      %v664 = vpop.f32.mrf.mxu0
      %v665 = vadd.f32 0.0, %v664
      %666 = vmatmul.f32.gmra.mxu0 %v483
      %v667 = vpop.f32.mrf.mxu0
      %v668 = vadd.f32 0.0, %v667
      %669 = vmatmul.f32.gmra.mxu0 %v486
      %v670 = vpop.f32.mrf.mxu0
      %v671 = vadd.f32 0.0, %v670
      %672 = vdwg.mxu0
      %v673 = vmax.f32 %v633, %v662
      %v674 = vmax.f32 %v634, %v665
      %v675 = vmax.f32 %v635, %v668
      %v676 = vmax.f32 %v636, %v671
      %v677 = vperm.slane %v385, 5
      %vm678 = vcmp.eq.s32.totalorder %v677, %v466
      %vm679 = vcmp.eq.s32.totalorder %v677, %v467
      %v680 = vsel %vm678, 1, 0
      %v681 = vsel %vm679, 1, 0
      %v682 = vcvt.s32.f32 %v680
      %v683 = vcvt.s32.f32 %v681
      %684 = vmatpush.msra.mxu0 0.0
      %685 = vmatpush.msra.mxu0 0.0
      %686 = vmatpush.msra.mxu0 0.0
      %687 = vmatpush.msra.mxu0 0.0
      %688 = vmatpush.msra.mxu0 0.0
      %689 = vmatpush.msra.mxu0 0.0
      %690 = vmatpush.msra.mxu0 0.0
      %691 = vmatpush.msra.mxu0 0.0
      %692 = vmatpush.msra.mxu0 0.0
      %693 = vmatpush.msra.mxu0 0.0
      %694 = vmatpush.msra.mxu0 0.0
      %695 = vmatpush.msra.mxu0 0.0
      %696 = vmatpush.msra.mxu0 0.0
      %697 = vmatpush.msra.mxu0 0.0
      %698 = vmatpush.msra.mxu0 %v683
      %699 = vmatpush.msra.mxu0 %v682
      %700 = vmatmul.f32.gmra.mxu0 %v477
      %v701 = vpop.f32.mrf.mxu0
      %v702 = vadd.f32 0.0, %v701
      %703 = vmatmul.f32.gmra.mxu0 %v480
      %v704 = vpop.f32.mrf.mxu0
      %v705 = vadd.f32 0.0, %v704
      %706 = vmatmul.f32.gmra.mxu0 %v483
      %v707 = vpop.f32.mrf.mxu0
      %v708 = vadd.f32 0.0, %v707
      %709 = vmatmul.f32.gmra.mxu0 %v486
      %v710 = vpop.f32.mrf.mxu0
      %v711 = vadd.f32 0.0, %v710
      %712 = vdwg.mxu0
      %v713 = vmax.f32 %v673, %v702
      %v714 = vmax.f32 %v674, %v705
      %v715 = vmax.f32 %v675, %v708
      %v716 = vmax.f32 %v676, %v711
      %v717 = vperm.slane %v385, 6
      %vm718 = vcmp.eq.s32.totalorder %v717, %v466
      %vm719 = vcmp.eq.s32.totalorder %v717, %v467
      %v720 = vsel %vm718, 1, 0
      %v721 = vsel %vm719, 1, 0
      %v722 = vcvt.s32.f32 %v720
      %v723 = vcvt.s32.f32 %v721
      %724 = vmatpush.msra.mxu0 0.0
      %725 = vmatpush.msra.mxu0 0.0
      %726 = vmatpush.msra.mxu0 0.0
      %727 = vmatpush.msra.mxu0 0.0
      %728 = vmatpush.msra.mxu0 0.0
      %729 = vmatpush.msra.mxu0 0.0
      %730 = vmatpush.msra.mxu0 0.0
      %731 = vmatpush.msra.mxu0 0.0
      %732 = vmatpush.msra.mxu0 0.0
      %733 = vmatpush.msra.mxu0 0.0
      %734 = vmatpush.msra.mxu0 0.0
      %735 = vmatpush.msra.mxu0 0.0
      %736 = vmatpush.msra.mxu0 0.0
      %737 = vmatpush.msra.mxu0 0.0
      %738 = vmatpush.msra.mxu0 %v723
      %739 = vmatpush.msra.mxu0 %v722
      %740 = vmatmul.f32.gmra.mxu0 %v477
      %v741 = vpop.f32.mrf.mxu0
      %v742 = vadd.f32 0.0, %v741
      %743 = vmatmul.f32.gmra.mxu0 %v480
      %v744 = vpop.f32.mrf.mxu0
      %v745 = vadd.f32 0.0, %v744
      %746 = vmatmul.f32.gmra.mxu0 %v483
      %v747 = vpop.f32.mrf.mxu0
      %v748 = vadd.f32 0.0, %v747
      %749 = vmatmul.f32.gmra.mxu0 %v486
      %v750 = vpop.f32.mrf.mxu0
      %v751 = vadd.f32 0.0, %v750
      %752 = vdwg.mxu0
      %v753 = vmax.f32 %v713, %v742
      %v754 = vmax.f32 %v714, %v745
      %v755 = vmax.f32 %v715, %v748
      %v756 = vmax.f32 %v716, %v751
      %v757 = vperm.slane %v385, 7
      %vm758 = vcmp.eq.s32.totalorder %v757, %v466
      %vm759 = vcmp.eq.s32.totalorder %v757, %v467
      %v760 = vsel %vm758, 1, 0
      %v761 = vsel %vm759, 1, 0
      %v762 = vcvt.s32.f32 %v760
      %v763 = vcvt.s32.f32 %v761
      %764 = vmatpush.msra.mxu0 0.0
      %765 = vmatpush.msra.mxu0 0.0
      %766 = vmatpush.msra.mxu0 0.0
      %767 = vmatpush.msra.mxu0 0.0
      %768 = vmatpush.msra.mxu0 0.0
      %769 = vmatpush.msra.mxu0 0.0
      %770 = vmatpush.msra.mxu0 0.0
      %771 = vmatpush.msra.mxu0 0.0
      %772 = vmatpush.msra.mxu0 0.0
      %773 = vmatpush.msra.mxu0 0.0
      %774 = vmatpush.msra.mxu0 0.0
      %775 = vmatpush.msra.mxu0 0.0
      %776 = vmatpush.msra.mxu0 0.0
      %777 = vmatpush.msra.mxu0 0.0
      %778 = vmatpush.msra.mxu0 %v763
      %779 = vmatpush.msra.mxu0 %v762
      %780 = vmatmul.f32.gmra.mxu0 %v477
      %v781 = vpop.f32.mrf.mxu0
      %v782 = vadd.f32 0.0, %v781
      %783 = vmatmul.f32.gmra.mxu0 %v480
      %v784 = vpop.f32.mrf.mxu0
      %v785 = vadd.f32 0.0, %v784
      %786 = vmatmul.f32.gmra.mxu0 %v483
      %v787 = vpop.f32.mrf.mxu0
      %v788 = vadd.f32 0.0, %v787
      %789 = vmatmul.f32.gmra.mxu0 %v486
      %v790 = vpop.f32.mrf.mxu0
      %v791 = vadd.f32 0.0, %v790
      %792 = vdwg.mxu0
      %v793 = vmax.f32 %v753, %v782
      %v794 = vmax.f32 %v754, %v785
      %v795 = vmax.f32 %v755, %v788
      %v796 = vmax.f32 %v756, %v791
      %v797 = vadd.f32 %v793, %v450
      %v798 = vadd.f32 %v794, %v453
      %v799 = vadd.f32 %v795, %v456
      %v800 = vadd.f32 %v796, %v459
      %vm801 = vcmp.ge.f32.partialorder %v797, 0.0
      %vm802 = vcmp.ge.f32.partialorder %v798, 0.0
      %vm803 = vcmp.ge.f32.partialorder %v799, 0.0
      %vm804 = vcmp.ge.f32.partialorder %v800, 0.0
      %v805 = vmul.f32 %v797, 0.2
      %v806 = vmul.f32 %v798, 0.2
      %v807 = vmul.f32 %v799, 0.2
      %v808 = vmul.f32 %v800, 0.2
      %v809 = vsel %vm801, %v797, %v805
      %v810 = vsel %vm802, %v798, %v806
      %v811 = vsel %vm803, %v799, %v807
      %v812 = vsel %vm804, %v800, %v808
      %813 = vst.msk [vmem:[%s324] sm:$0xff] %vm475, %v809
      %814 = vst.msk [vmem:[%s324 + $0x8] sm:$0xff] %vm475, %v810
      %815 = vst.msk [vmem:[%s324 + $0x10] sm:$0xff] %vm475, %v811
      %816 = vst.msk [vmem:[%s324 + $0x18] sm:$0xff] %vm475, %v812
      %p817 = scmp.lt.s32.totalorder %s21, 1
      %s818 = scalar_select %p817, %s21, 1
      %p819 = scmp.lt.s32.totalorder %s22, 0
      %s820 = scalar_select %p819, %s22, 0
      %s821 = smul.addr %s818, 4
      %s822 = sadd.s32 %s820, %s821
      %s823 = smul.addr %s822, 8
      %s824 = scalar_lea.vmem %s6, %s823
      // Predicated region
      $region49: #{local_embedder_forward.5} parent=43 // pred_check
        %p825 = pneg %p194
      $region50: #{local_embedder_forward.5} parent=43 // pred_check_branch
        %827 = sbr.rel (%p825) target = $region52
      $region51: #{local_embedder_forward.5} parent=43 // pred_region
        _
      $region52: #{local_embedder_forward.5} parent=43 // pred_fallthru
        _
    $region44: #{local_embedder_forward.5} parent=5 // pred_fallthru
      _
    %p828 = scmp.le.s32.totalorder 2, %s12
    // Predicated region
    $region53: #{local_embedder_forward.5} parent=5 // pred_check
      %p829 = pneg %p828
    $region54: #{local_embedder_forward.5} parent=5 // pred_check_branch
      %831 = sbr.rel (%p829) target = $region56
    $region55: #{local_embedder_forward.5} parent=5 // pred_region
      %s832 = ssub.s32 %s12, 2
      // Predicated region
      $region57: #{local_embedder_forward.5} parent=55 // pred_check
        %p833 = pneg %p200
      $region58: #{local_embedder_forward.5} parent=55 // pred_check_branch
        %835 = sbr.rel (%p833) target = $region60
      $region59: #{local_embedder_forward.5} parent=55 // pred_region
        %p836 = scmp.lt.s32.totalorder %s23, 1
        %s837 = scalar_select %p836, %s23, 1
        %p838 = scmp.lt.s32.totalorder %s24, 0
        %s839 = scalar_select %p838, %s24, 0
        %s840 = smul.addr %s837, 4
        %s841 = sadd.s32 %s839, %s840
        %s842 = smul.addr %s841, 8
        %s843 = scalar_lea.vmem %s6, %s842
      $region60: #{local_embedder_forward.5} parent=55 // pred_fallthru
        _
    $region56: #{local_embedder_forward.5} parent=5 // pred_fallthru
      _
  $region6: #{local_embedder_forward.5} parent=0 // loop_footer
    %s16 = sadd.s32 1, %s12
  $region7: #{local_embedder_forward.5} parent=0 // loop_footer_branch
    %11 = sbr.rel target = $region3
  $region8: #{local_embedder_forward.5} parent=0 // loop_exit
    _

</llo_original>
